<compile_context>
chip_gen: v5e
topology: v5e:2x2
jax: 0.10.0
libtpu: 0.0.40
codegen_flags: <defaults>
</compile_context>

<pallas_src>
import functools

import jax
import jax.numpy as jnp
from jax import lax
from jax.experimental import pallas as pl
from jax.experimental.pallas import tpu as pltpu

BN_EPS = 1e-5
VMEM_LIMIT = 48 * 1024 * 1024   # <= v7x 64 MiB physical, generous on v5e/v6e


def _round_up(a, b):
    return (a + b - 1) // b * b


def _lane_pad(cout):
    # Lane-dense MXU N dimension: 128 for small Cout, multiples of 256 once
    # Cout exceeds 128 (full-width issue on v6e/v7x 2x256x256 MXUs).
    return _round_up(cout, 256 if cout > 128 else 128)


def _compiler_params():
    return pltpu.CompilerParams(dimension_semantics=("parallel",),
                                vmem_limit_bytes=VMEM_LIMIT)


# ----------------------------- Pallas kernels ------------------------------ #

def _conv1_stats_kernel(p_ref, w_ref, y_ref, s_ref, sq_ref):
    """conv1 as one per-sample matmul (im2col patches), f32 accumulation.
    No conv bias (cancels under batch-stat BN) and no row masking (per-sample
    blocks have no padded rows).  Emits per-step partial BN statistics."""
    y = jnp.dot(p_ref[0], w_ref[...], preferred_element_type=jnp.float32)
    y_ref[0] = y.astype(y_ref.dtype)
    s_ref[0] = jnp.sum(y, axis=0, keepdims=True)
    sq_ref[0] = jnp.sum(y * y, axis=0, keepdims=True)


def _make_conv2_stats_kernel(h_out, w_out, cp, cd):
    """conv2 (3x3, stride 1, pad 1) with in-kernel tap extraction.

    Per grid step (one batch sample):
      z = relu(bn1_affine(y1_raw))                       (f32 math)
      zf[1 + h*W + w] = z[h-1, w], zero halo rows/ends   (VMEM scratch)
      y2 = sum_{di,dj} masked_slice(zf, di*W + dj) @ w2[di,dj]
    Column-wrap taps (dj==0 / dj==2) are masked; row taps hit zero pad rows.
    """
    m2 = h_out * w_out
    pf = _round_up(m2 + 2 * w_out + 2, 8)
    head = w_out + 1
    tail_start = head + m2
    tail = pf - tail_start

    def kernel(y1_ref, sc_ref, sh_ref, w_ref, y2_ref, s_ref, sq_ref, zf_ref):
        # bn1 affine + ReLU fused into the conv2 load path.
        z = jnp.maximum(
            y1_ref[0].astype(jnp.float32) * sc_ref[...] + sh_ref[...], 0.0)

        # Halo bands zeroed every step (megacore-safe), interior overwritten.
        zf_ref[pl.ds(0, head), :] = jnp.zeros((head, cp), cd)
        zf_ref[pl.ds(tail_start, tail), :] = jnp.zeros((tail, cp), cd)
        zf_ref[pl.ds(head, m2), :] = z.astype(cd)

        col = lax.broadcasted_iota(jnp.int32, (m2, 1), 0) % w_out
        acc = jnp.zeros((m2, cp), jnp.float32)
        for di in range(3):
            for dj in range(3):
                tap = zf_ref[pl.ds(di * w_out + dj, m2), :]
                if dj == 0:       # left tap wraps to previous row at wo==0
                    tap = jnp.where(col > 0, tap, jnp.zeros_like(tap))
                elif dj == 2:     # right tap wraps to next row at wo==W-1
                    tap = jnp.where(col < w_out - 1, tap, jnp.zeros_like(tap))
                acc = acc + jnp.dot(tap, w_ref[di * 3 + dj],
                                    preferred_element_type=jnp.float32)

        y2_ref[0] = acc.astype(y2_ref.dtype)
        s_ref[0] = jnp.sum(acc, axis=0, keepdims=True)
        sq_ref[0] = jnp.sum(acc * acc, axis=0, keepdims=True)

    return kernel, pf


def _finalize_kernel(y2_ref, sc_ref, sh_ref, ps_ref, w3_ref, b3_ref, o_ref):
    """bn2 normalize + 1x1-strided skip conv (+bias) + residual add + ReLU."""
    y = y2_ref[0].astype(jnp.float32) * sc_ref[...] + sh_ref[...]
    skip = jnp.dot(ps_ref[0], w3_ref[...], preferred_element_type=jnp.float32)
    skip = skip + b3_ref[...]
    o_ref[0] = jnp.maximum(y + skip, 0.0)


# --------------------------- pallas_call wrappers --------------------------- #

def _conv1_call(p, w, *, n, m2, cp, cd):
    k1 = p.shape[-1]
    return pl.pallas_call(
        _conv1_stats_kernel,
        grid=(n,),
        in_specs=[
            pl.BlockSpec((1, m2, k1), lambda i: (i, 0, 0)),   # patches (streamed)
            pl.BlockSpec((k1, cp), lambda i: (0, 0)),         # weights (resident)
        ],
        out_specs=(
            pl.BlockSpec((1, m2, cp), lambda i: (i, 0, 0)),   # y1_raw
            pl.BlockSpec((1, 1, cp), lambda i: (i, 0, 0)),    # partial sum
            pl.BlockSpec((1, 1, cp), lambda i: (i, 0, 0)),    # partial sumsq
        ),
        out_shape=(
            jax.ShapeDtypeStruct((n, m2, cp), cd),
            jax.ShapeDtypeStruct((n, 1, cp), jnp.float32),
            jax.ShapeDtypeStruct((n, 1, cp), jnp.float32),
        ),
        compiler_params=_compiler_params(),
    )(p, w)


def _conv2_call(y1, scale1, shift1, w2taps, *, n, h_out, w_out, cp, cd):
    m2 = h_out * w_out
    kernel, pf = _make_conv2_stats_kernel(h_out, w_out, cp, cd)
    return pl.pallas_call(
        kernel,
        grid=(n,),
        in_specs=[
            pl.BlockSpec((1, m2, cp), lambda i: (i, 0, 0)),   # y1_raw (streamed)
            pl.BlockSpec((1, cp), lambda i: (0, 0)),          # bn1 scale
            pl.BlockSpec((1, cp), lambda i: (0, 0)),          # bn1 shift
            pl.BlockSpec((9, cp, cp), lambda i: (0, 0, 0)),   # conv2 tap weights
        ],
        out_specs=(
            pl.BlockSpec((1, m2, cp), lambda i: (i, 0, 0)),   # y2_raw
            pl.BlockSpec((1, 1, cp), lambda i: (i, 0, 0)),    # partial sum
            pl.BlockSpec((1, 1, cp), lambda i: (i, 0, 0)),    # partial sumsq
        ),
        out_shape=(
            jax.ShapeDtypeStruct((n, m2, cp), cd),
            jax.ShapeDtypeStruct((n, 1, cp), jnp.float32),
            jax.ShapeDtypeStruct((n, 1, cp), jnp.float32),
        ),
        scratch_shapes=[pltpu.VMEM((pf, cp), cd)],            # row-padded sample
        compiler_params=_compiler_params(),
    )(y1, scale1, shift1, w2taps)


def _finalize_call(y2, scale2, shift2, ps, w3, b3, *, n, m2, cp):
    kin = ps.shape[-1]
    return pl.pallas_call(
        _finalize_kernel,
        grid=(n,),
        in_specs=[
            pl.BlockSpec((1, m2, cp), lambda i: (i, 0, 0)),   # y2_raw (streamed)
            pl.BlockSpec((1, cp), lambda i: (0, 0)),          # bn2 scale
            pl.BlockSpec((1, cp), lambda i: (0, 0)),          # bn2 shift
            pl.BlockSpec((1, m2, kin), lambda i: (i, 0, 0)),  # skip patches
            pl.BlockSpec((kin, cp), lambda i: (0, 0)),        # skip weights
            pl.BlockSpec((1, cp), lambda i: (0, 0)),          # skip bias
        ],
        out_specs=pl.BlockSpec((1, m2, cp), lambda i: (i, 0, 0)),
        out_shape=jax.ShapeDtypeStruct((n, m2, cp), jnp.float32),
        compiler_params=_compiler_params(),
    )(y2, scale2, shift2, ps, w3, b3)


# ------------------------------ JAX glue ----------------------------------- #

def _bn_affine(s, ss, count):
    """Fold batch statistics (from per-step partial sums) into scale/shift."""
    mean = jnp.sum(s, axis=(0, 1)) / count
    var = jnp.maximum(jnp.sum(ss, axis=(0, 1)) / count - mean * mean, 0.0)
    scale = lax.rsqrt(var + BN_EPS)
    shift = -mean * scale
    return scale.reshape(1, -1), shift.reshape(1, -1)


def _im2col3x3(x_nhwc, stride):
    """3x3 patches -> (N, Hout*Wout, 9*C), tap-major channel-minor.
    Used for conv1 only (stride-s): blow-up is 9/stride^2 on the small-Cin
    input.  TODO(synk): move to in-kernel phase-split tap extraction."""
    x = jnp.pad(x_nhwc, ((0, 0), (1, 1), (1, 1), (0, 0)))
    n, hp, wp, c = x.shape
    h_out = (hp - 3) // stride + 1
    w_out = (wp - 3) // stride + 1
    cols = []
    for i in range(3):
        for j in range(3):
            cols.append(x[:, i:i + (h_out - 1) * stride + 1:stride,
                          j:j + (w_out - 1) * stride + 1:stride, :])
    patches = jnp.concatenate(cols, axis=-1)
    return patches.reshape(n, h_out * w_out, 9 * c), h_out, w_out


@functools.partial(jax.jit, static_argnames=("strides", "compute_dtype"))
def residual_forward(x_nchw, params, strides, *, compute_dtype=jnp.bfloat16):
    """Pallas implementation of Residual.forward (use_1x1conv=True)."""
    x = jnp.transpose(x_nchw, (0, 2, 3, 1)).astype(jnp.float32)   # NCHW -> NHWC
    n, h, w, cin = x.shape
    cout = params["w1"].shape[-1]
    cp = _lane_pad(cout)
    cd = compute_dtype

    # ---- conv1 (3x3, pad 1, stride s) + bn1 partial stats -------------------
    p1, h2, w2 = _im2col3x3(x, strides)
    m2 = h2 * w2
    w1m = jnp.pad(params["w1"].reshape(9 * cin, cout),
                  ((0, 0), (0, cp - cout))).astype(cd)
    y1_raw, s1, ss1 = _conv1_call(p1.astype(cd), w1m, n=n, m2=m2, cp=cp, cd=cd)
    scale1, shift1 = _bn_affine(s1, ss1, n * m2)

    # ---- conv2 (3x3, pad 1, stride 1): in-kernel taps, fused bn1+ReLU -------
    w2taps = jnp.pad(params["w2"].reshape(9, cout, cout),
                     ((0, 0), (0, cp - cout), (0, cp - cout))).astype(cd)
    y2_raw, s2, ss2 = _conv2_call(y1_raw, scale1, shift1, w2taps,
                                  n=n, h_out=h2, w_out=w2, cp=cp, cd=cd)
    scale2, shift2 = _bn_affine(s2, ss2, n * m2)

    # ---- bn2 normalize + skip (1x1, stride s) + add + ReLU ------------------
    ps = x[:, ::strides, ::strides, :].reshape(n, m2, cin).astype(cd)
    w3m = jnp.pad(params["w3"].reshape(cin, cout),
                  ((0, 0), (0, cp - cout))).astype(cd)
    b3 = jnp.pad(params["b3"].reshape(1, cout),
                 ((0, 0), (0, cp - cout))).astype(jnp.float32)
    out = _finalize_call(y2_raw, scale2, shift2, ps, w3m, b3, n=n, m2=m2, cp=cp)

    out = out[:, :, :cout].reshape(n, h2, w2, cout)
    return jnp.transpose(out, (0, 3, 1, 2))                       # NHWC -> NCHW


def residual_reference(x_nchw, params, strides, compute_dtype=jnp.float32):
    """Pure-JAX reference (mirrors the PyTorch forward in training mode)."""
    x = jnp.transpose(x_nchw, (0, 2, 3, 1)).astype(jnp.float32)
    dn = ("NHWC", "HWIO", "NHWC")

    def conv(inp, w, b, stride, pad):
        y = lax.conv_general_dilated(
            inp.astype(compute_dtype), w.astype(compute_dtype),
            (stride, stride), [(pad, pad), (pad, pad)],
            dimension_numbers=dn, preferred_element_type=jnp.float32)
        return y + b

    def bn(y):
        mean = jnp.mean(y, axis=(0, 1, 2), keepdims=True)
        var = jnp.mean((y - mean) ** 2, axis=(0, 1, 2), keepdims=True)
        return (y - mean) * lax.rsqrt(var + BN_EPS)

    y = jax.nn.relu(bn(conv(x, params["w1"], params["b1"], strides, 1)))
    y = bn(conv(y, params["w2"], params["b2"], 1, 1))
    skip = conv(x, params["w3"], params["b3"], strides, 0)
    return jnp.transpose(jax.nn.relu(y + skip), (0, 3, 1, 2))


# --------------------------------- main ------------------------------------ #

if __name__ == "__main__":
    # Small shapes consistent with Residual(input_channels, num_channels,
    # use_1x1conv=True, strides=2):
    N, CIN, COUT, HW, STRIDES = 2, 4, 8, 16, 2

    key = jax.random.PRNGKey(0)
    kx, k1, k2, k3, kb1, kb2, kb3 = jax.random.split(key, 7)

    x = jax.random.uniform(kx, (N, CIN, HW, HW), dtype=jnp.float32)

    params = {
        # conv weights stored as (KH, KW, Cin, Cout); biases as (Cout,)
        "w1": 0.1 * jax.random.normal(k1, (3, 3, CIN, COUT), dtype=jnp.float32),
        "b1": 0.1 * jax.random.normal(kb1, (COUT,), dtype=jnp.float32),
        "w2": 0.1 * jax.random.normal(k2, (3, 3, COUT, COUT), dtype=jnp.float32),
        "b2": 0.1 * jax.random.normal(kb2, (COUT,), dtype=jnp.float32),
        "w3": 0.1 * jax.random.normal(k3, (1, 1, CIN, COUT), dtype=jnp.float32),
        "b3": 0.1 * jax.random.normal(kb3, (COUT,), dtype=jnp.float32),
    }

    # f32 operands / f32 intermediates: tight check against the f32 reference.
    out_f32 = residual_forward(x, params, strides=STRIDES,
                               compute_dtype=jnp.float32)
    out_f32 = jax.block_until_ready(out_f32)
    ref_f32 = jax.block_until_ready(
        residual_reference(x, params, STRIDES, jnp.float32))
    assert out_f32.shape == (N, COUT, HW // STRIDES, HW // STRIDES), out_f32.shape
    assert jnp.allclose(out_f32, ref_f32, rtol=2e-3, atol=2e-3), \
        float(jnp.max(jnp.abs(out_f32 - ref_f32)))

    # bf16 fast path (bf16 MXU operands + bf16 intermediate storage): looser
    # tolerance against a bf16-operand reference.
    out_bf16 = residual_forward(x, params, strides=STRIDES,
                                compute_dtype=jnp.bfloat16)
    out_bf16 = jax.block_until_ready(out_bf16)
    ref_bf16 = jax.block_until_ready(
        residual_reference(x, params, STRIDES, jnp.bfloat16))
    assert jnp.allclose(out_bf16, ref_bf16, rtol=5e-2, atol=5e-2), \
        float(jnp.max(jnp.abs(out_bf16 - ref_bf16)))

    print("KERNEL_OK")
</pallas_src>

<mosaic_0001>
module attributes {stable_mosaic.version = 11 : i64} {
  func.func @_conv1_stats_kernel(%arg0: i32, %arg1: memref<1x64x36xf32, #tpu.memory_space<vmem>>, %arg2: memref<36x128xf32, #tpu.memory_space<vmem>>, %arg3: memref<1x64x128xf32, #tpu.memory_space<vmem>>, %arg4: memref<1x1x128xf32, #tpu.memory_space<vmem>>, %arg5: memref<1x1x128xf32, #tpu.memory_space<vmem>>) attributes {dimension_semantics = [#tpu.dimension_semantics<parallel>], iteration_bounds = array<i64: 2>, scalar_prefetch = 0 : i64, scratch_operands = 0 : i64, tpu.core_type = #tpu.core_type<tc>, window_params = [{transform_indices = @transform_0, window_bounds = array<i64: 1, 64, 36>}, {pipeline_mode = #tpu.pipeline_mode<synchronous>, transform_indices = @transform_1, window_bounds = array<i64: 36, 128>}, {transform_indices = @transform_2, window_bounds = array<i64: 1, 64, 128>}, {transform_indices = @transform_3, window_bounds = array<i64: 1, 1, 128>}, {transform_indices = @transform_4, window_bounds = array<i64: 1, 1, 128>}]} {
    %c0 = arith.constant 0 : index
    %c0_0 = arith.constant 0 : index
    %c0_1 = arith.constant 0 : index
    %0 = vector.load %arg1[%c0, %c0_0, %c0_1] : memref<1x64x36xf32, #tpu.memory_space<vmem>>, vector<1x64x36xf32>
    %1 = vector.shape_cast %0 : vector<1x64x36xf32> to vector<64x36xf32>
    %c0_2 = arith.constant 0 : index
    %c0_3 = arith.constant 0 : index
    %2 = vector.load %arg2[%c0_2, %c0_3] : memref<36x128xf32, #tpu.memory_space<vmem>>, vector<36x128xf32>
    %cst = arith.constant dense<0.000000e+00> : vector<64x128xf32>
    %3 = tpu.matmul %1, %2, %cst {dimension_numbers = #tpu.dot_dimension_numbers<[1], [0], [0], [1], [0, 0, 1, 1], [], []>} : vector<64x36xf32>, vector<36x128xf32>, vector<64x128xf32> -> vector<64x128xf32>
    %c0_4 = arith.constant 0 : index
    %c0_5 = arith.constant 0 : index
    %c0_6 = arith.constant 0 : index
    %4 = vector.load %arg3[%c0_4, %c0_5, %c0_6] : memref<1x64x128xf32, #tpu.memory_space<vmem>>, vector<1x64x128xf32>
    %5 = vector.shape_cast %4 : vector<1x64x128xf32> to vector<64x128xf32>
    %6 = vector.shape_cast %3 : vector<64x128xf32> to vector<1x64x128xf32>
    tpu.vector_store %arg3[%c0_4, %c0_5, %c0_6], %6 {strides = array<i32>} : memref<1x64x128xf32, #tpu.memory_space<vmem>>, vector<1x64x128xf32>,
    %cst_7 = arith.constant dense<0.000000e+00> : vector<128xf32>
    %7 = vector.multi_reduction <add>, %3, %cst_7 [0] : vector<64x128xf32> to vector<128xf32>
    %8 = vector.shape_cast %7 : vector<128xf32> to vector<1x128xf32>
    %c0_8 = arith.constant 0 : index
    %c0_9 = arith.constant 0 : index
    %c0_10 = arith.constant 0 : index
    %9 = vector.load %arg4[%c0_8, %c0_9, %c0_10] : memref<1x1x128xf32, #tpu.memory_space<vmem>>, vector<1x1x128xf32>
    %10 = vector.shape_cast %9 : vector<1x1x128xf32> to vector<1x128xf32>
    %11 = vector.shape_cast %8 : vector<1x128xf32> to vector<1x1x128xf32>
    tpu.vector_store %arg4[%c0_8, %c0_9, %c0_10], %11 {strides = array<i32>} : memref<1x1x128xf32, #tpu.memory_space<vmem>>, vector<1x1x128xf32>,
    %12 = arith.mulf %3, %3 : vector<64x128xf32>
    %cst_11 = arith.constant dense<0.000000e+00> : vector<128xf32>
    %13 = vector.multi_reduction <add>, %12, %cst_11 [0] : vector<64x128xf32> to vector<128xf32>
    %14 = vector.shape_cast %13 : vector<128xf32> to vector<1x128xf32>
    %c0_12 = arith.constant 0 : index
    %c0_13 = arith.constant 0 : index
    %c0_14 = arith.constant 0 : index
    %15 = vector.load %arg5[%c0_12, %c0_13, %c0_14] : memref<1x1x128xf32, #tpu.memory_space<vmem>>, vector<1x1x128xf32>
    %16 = vector.shape_cast %15 : vector<1x1x128xf32> to vector<1x128xf32>
    %17 = vector.shape_cast %14 : vector<1x128xf32> to vector<1x1x128xf32>
    tpu.vector_store %arg5[%c0_12, %c0_13, %c0_14], %17 {strides = array<i32>} : memref<1x1x128xf32, #tpu.memory_space<vmem>>, vector<1x1x128xf32>,
    return
  }
  func.func @transform_0(%arg0: i32) -> (i32, i32, i32) {
    %c0_i32 = arith.constant 0 : i32
    %c0_i32_0 = arith.constant 0 : i32
    %c0_i32_1 = arith.constant 0 : i32
    return %arg0, %c0_i32, %c0_i32_0 : i32, i32, i32
  }
  func.func @transform_1(%arg0: i32) -> (i32, i32) {
    %c0_i32 = arith.constant 0 : i32
    %c0_i32_0 = arith.constant 0 : i32
    %c0_i32_1 = arith.constant 0 : i32
    return %c0_i32, %c0_i32_0 : i32, i32
  }
  func.func @transform_2(%arg0: i32) -> (i32, i32, i32) {
    %c0_i32 = arith.constant 0 : i32
    %c0_i32_0 = arith.constant 0 : i32
    %c0_i32_1 = arith.constant 0 : i32
    return %arg0, %c0_i32, %c0_i32_0 : i32, i32, i32
  }
  func.func @transform_3(%arg0: i32) -> (i32, i32, i32) {
    %c0_i32 = arith.constant 0 : i32
    %c0_i32_0 = arith.constant 0 : i32
    %c0_i32_1 = arith.constant 0 : i32
    return %arg0, %c0_i32, %c0_i32_0 : i32, i32, i32
  }
  func.func @transform_4(%arg0: i32) -> (i32, i32, i32) {
    %c0_i32 = arith.constant 0 : i32
    %c0_i32_0 = arith.constant 0 : i32
    %c0_i32_1 = arith.constant 0 : i32
    return %arg0, %c0_i32, %c0_i32_0 : i32, i32, i32
  }
}

module attributes {stable_mosaic.version = 11 : i64} {
  func.func @kernel(%arg0: i32, %arg1: memref<1x64x128xf32, #tpu.memory_space<vmem>>, %arg2: memref<1x128xf32, #tpu.memory_space<vmem>>, %arg3: memref<1x128xf32, #tpu.memory_space<vmem>>, %arg4: memref<9x128x128xf32, #tpu.memory_space<vmem>>, %arg5: memref<1x64x128xf32, #tpu.memory_space<vmem>>, %arg6: memref<1x1x128xf32, #tpu.memory_space<vmem>>, %arg7: memref<1x1x128xf32, #tpu.memory_space<vmem>>, %arg8: memref<88x128xf32, #tpu.memory_space<vmem>>) attributes {dimension_semantics = [#tpu.dimension_semantics<parallel>], iteration_bounds = array<i64: 2>, scalar_prefetch = 0 : i64, scratch_operands = 1 : i64, tpu.core_type = #tpu.core_type<tc>, window_params = [{transform_indices = @transform_0, window_bounds = array<i64: 1, 64, 128>}, {pipeline_mode = #tpu.pipeline_mode<synchronous>, transform_indices = @transform_1, window_bounds = array<i64: 1, 128>}, {pipeline_mode = #tpu.pipeline_mode<synchronous>, transform_indices = @transform_2, window_bounds = array<i64: 1, 128>}, {pipeline_mode = #tpu.pipeline_mode<synchronous>, transform_indices = @transform_3, window_bounds = array<i64: 9, 128, 128>}, {transform_indices = @transform_4, window_bounds = array<i64: 1, 64, 128>}, {transform_indices = @transform_5, window_bounds = array<i64: 1, 1, 128>}, {transform_indices = @transform_6, window_bounds = array<i64: 1, 1, 128>}]} {
    %c0 = arith.constant 0 : index
    %c0_0 = arith.constant 0 : index
    %c0_1 = arith.constant 0 : index
    %0 = vector.load %arg1[%c0, %c0_0, %c0_1] : memref<1x64x128xf32, #tpu.memory_space<vmem>>, vector<1x64x128xf32>
    %1 = vector.shape_cast %0 : vector<1x64x128xf32> to vector<64x128xf32>
    %c0_2 = arith.constant 0 : index
    %c0_3 = arith.constant 0 : index
    %2 = vector.load %arg2[%c0_2, %c0_3] : memref<1x128xf32, #tpu.memory_space<vmem>>, vector<1x128xf32>
    %3 = vector.broadcast %2 : vector<1x128xf32> to vector<64x128xf32>
    %4 = arith.mulf %1, %3 : vector<64x128xf32>
    %c0_4 = arith.constant 0 : index
    %c0_5 = arith.constant 0 : index
    %5 = vector.load %arg3[%c0_4, %c0_5] : memref<1x128xf32, #tpu.memory_space<vmem>>, vector<1x128xf32>
    %6 = vector.broadcast %5 : vector<1x128xf32> to vector<64x128xf32>
    %7 = arith.addf %4, %6 : vector<64x128xf32>
    %cst = arith.constant 0.000000e+00 : f32
    %8 = vector.broadcast %cst : f32 to vector<64x128xf32>
    %9 = arith.maximumf %7, %8 : vector<64x128xf32>
    %cst_6 = arith.constant 0.000000e+00 : f32
    %10 = vector.broadcast %cst_6 : f32 to vector<9x128xf32>
    %c0_7 = arith.constant 0 : index
    %c0_8 = arith.constant 0 : index
    %11 = vector.load %arg8[%c0_7, %c0_8] : memref<88x128xf32, #tpu.memory_space<vmem>>, vector<9x128xf32>
    tpu.vector_store %arg8[%c0_7, %c0_8], %10 {strides = array<i32>} : memref<88x128xf32, #tpu.memory_space<vmem>>, vector<9x128xf32>,
    %cst_9 = arith.constant 0.000000e+00 : f32
    %12 = vector.broadcast %cst_9 : f32 to vector<15x128xf32>
    %c73 = arith.constant 73 : index
    %c0_10 = arith.constant 0 : index
    %13 = vector.load %arg8[%c73, %c0_10] : memref<88x128xf32, #tpu.memory_space<vmem>>, vector<15x128xf32>
    tpu.vector_store %arg8[%c73, %c0_10], %12 {strides = array<i32>} : memref<88x128xf32, #tpu.memory_space<vmem>>, vector<15x128xf32>,
    %c9 = arith.constant 9 : index
    %c0_11 = arith.constant 0 : index
    %14 = vector.load %arg8[%c9, %c0_11] : memref<88x128xf32, #tpu.memory_space<vmem>>, vector<64x128xf32>
    tpu.vector_store %arg8[%c9, %c0_11], %9 {strides = array<i32>} : memref<88x128xf32, #tpu.memory_space<vmem>>, vector<64x128xf32>,
    %15 = tpu.iota {dimensions = array<i32: 0>} : vector<64x1xi32>
    %c8_i32 = arith.constant 8 : i32
    %c0_i32 = arith.constant 0 : i32
    %16 = arith.cmpi eq, %c8_i32, %c0_i32 : i32
    %c1_i32 = arith.constant 1 : i32
    %17 = arith.select %16, %c1_i32, %c8_i32 : i32
    %18 = vector.broadcast %17 : i32 to vector<64x1xi32>
    %19 = arith.remsi %15, %18 : vector<64x1xi32>
    %c0_i32_12 = arith.constant 0 : i32
    %20 = vector.broadcast %c0_i32_12 : i32 to vector<64x1xi32>
    %21 = arith.cmpi ne, %19, %20 : vector<64x1xi32>
    %c0_i32_13 = arith.constant 0 : i32
    %22 = vector.broadcast %c0_i32_13 : i32 to vector<64x1xi32>
    %23 = arith.cmpi slt, %19, %22 : vector<64x1xi32>
    %c0_i32_14 = arith.constant 0 : i32
    %24 = arith.cmpi slt, %17, %c0_i32_14 : i32
    %25 = vector.broadcast %24 : i1 to vector<64x1xi1>
    %26 = vector.broadcast %25 : vector<64x1xi1> to vector<64x1xi1>
    %27 = arith.xori %23, %26 : vector<64x1xi1>
    %28 = arith.andi %27, %21 : vector<64x1xi1>
    %29 = vector.broadcast %17 : i32 to vector<64x1xi32>
    %30 = arith.addi %19, %29 : vector<64x1xi32>
    %31 = arith.select %28, %30, %19 : vector<64x1xi1>, vector<64x1xi32>
    %cst_15 = arith.constant 0.000000e+00 : f32
    %32 = vector.broadcast %cst_15 : f32 to vector<64x128xf32>
    %c0_16 = arith.constant 0 : index
    %c0_17 = arith.constant 0 : index
    %33 = vector.load %arg8[%c0_16, %c0_17] : memref<88x128xf32, #tpu.memory_space<vmem>>, vector<64x128xf32>
    %c0_i32_18 = arith.constant 0 : i32
    %34 = vector.broadcast %c0_i32_18 : i32 to vector<64x1xi32>
    %35 = arith.cmpi sgt, %31, %34 : vector<64x1xi32>
    %cst_19 = arith.constant 0.000000e+00 : f32
    %36 = vector.broadcast %cst_19 : f32 to vector<64x128xf32>
    %37 = vector.shape_cast %35 : vector<64x1xi1> to vector<64x1xi1>
    %38 = vector.broadcast %37 : vector<64x1xi1> to vector<64x128xi1>
    %39 = arith.select %38, %33, %36 : vector<64x128xi1>, vector<64x128xf32>
    %c0_20 = arith.constant 0 : index
    %c0_21 = arith.constant 0 : index
    %c0_22 = arith.constant 0 : index
    %40 = vector.load %arg4[%c0_20, %c0_21, %c0_22] : memref<9x128x128xf32, #tpu.memory_space<vmem>>, vector<1x128x128xf32>
    %41 = vector.shape_cast %40 : vector<1x128x128xf32> to vector<128x128xf32>
    %cst_23 = arith.constant dense<0.000000e+00> : vector<64x128xf32>
    %42 = tpu.matmul %39, %41, %cst_23 {dimension_numbers = #tpu.dot_dimension_numbers<[1], [0], [0], [1], [0, 0, 1, 1], [], []>} : vector<64x128xf32>, vector<128x128xf32>, vector<64x128xf32> -> vector<64x128xf32>
    %43 = arith.addf %32, %42 : vector<64x128xf32>
    %c1 = arith.constant 1 : index
    %c0_24 = arith.constant 0 : index
    %44 = vector.load %arg8[%c1, %c0_24] : memref<88x128xf32, #tpu.memory_space<vmem>>, vector<64x128xf32>
    %c1_25 = arith.constant 1 : index
    %c0_26 = arith.constant 0 : index
    %c0_27 = arith.constant 0 : index
    %45 = vector.load %arg4[%c1_25, %c0_26, %c0_27] : memref<9x128x128xf32, #tpu.memory_space<vmem>>, vector<1x128x128xf32>
    %46 = vector.shape_cast %45 : vector<1x128x128xf32> to vector<128x128xf32>
    %cst_28 = arith.constant dense<0.000000e+00> : vector<64x128xf32>
    %47 = tpu.matmul %44, %46, %cst_28 {dimension_numbers = #tpu.dot_dimension_numbers<[1], [0], [0], [1], [0, 0, 1, 1], [], []>} : vector<64x128xf32>, vector<128x128xf32>, vector<64x128xf32> -> vector<64x128xf32>
    %48 = arith.addf %43, %47 : vector<64x128xf32>
    %c2 = arith.constant 2 : index
    %c0_29 = arith.constant 0 : index
    %49 = vector.load %arg8[%c2, %c0_29] : memref<88x128xf32, #tpu.memory_space<vmem>>, vector<64x128xf32>
    %c7_i32 = arith.constant 7 : i32
    %50 = vector.broadcast %c7_i32 : i32 to vector<64x1xi32>
    %51 = arith.cmpi slt, %31, %50 : vector<64x1xi32>
    %cst_30 = arith.constant 0.000000e+00 : f32
    %52 = vector.broadcast %cst_30 : f32 to vector<64x128xf32>
    %53 = vector.shape_cast %51 : vector<64x1xi1> to vector<64x1xi1>
    %54 = vector.broadcast %53 : vector<64x1xi1> to vector<64x128xi1>
    %55 = arith.select %54, %49, %52 : vector<64x128xi1>, vector<64x128xf32>
    %c2_31 = arith.constant 2 : index
    %c0_32 = arith.constant 0 : index
    %c0_33 = arith.constant 0 : index
    %56 = vector.load %arg4[%c2_31, %c0_32, %c0_33] : memref<9x128x128xf32, #tpu.memory_space<vmem>>, vector<1x128x128xf32>
    %57 = vector.shape_cast %56 : vector<1x128x128xf32> to vector<128x128xf32>
    %cst_34 = arith.constant dense<0.000000e+00> : vector<64x128xf32>
    %58 = tpu.matmul %55, %57, %cst_34 {dimension_numbers = #tpu.dot_dimension_numbers<[1], [0], [0], [1], [0, 0, 1, 1], [], []>} : vector<64x128xf32>, vector<128x128xf32>, vector<64x128xf32> -> vector<64x128xf32>
    %59 = arith.addf %48, %58 : vector<64x128xf32>
    %c8 = arith.constant 8 : index
    %c0_35 = arith.constant 0 : index
    %60 = vector.load %arg8[%c8, %c0_35] : memref<88x128xf32, #tpu.memory_space<vmem>>, vector<64x128xf32>
    %c0_i32_36 = arith.constant 0 : i32
    %61 = vector.broadcast %c0_i32_36 : i32 to vector<64x1xi32>
    %62 = arith.cmpi sgt, %31, %61 : vector<64x1xi32>
    %cst_37 = arith.constant 0.000000e+00 : f32
    %63 = vector.broadcast %cst_37 : f32 to vector<64x128xf32>
    %64 = vector.shape_cast %62 : vector<64x1xi1> to vector<64x1xi1>
    %65 = vector.broadcast %64 : vector<64x1xi1> to vector<64x128xi1>
    %66 = arith.select %65, %60, %63 : vector<64x128xi1>, vector<64x128xf32>
    %c3 = arith.constant 3 : index
    %c0_38 = arith.constant 0 : index
    %c0_39 = arith.constant 0 : index
    %67 = vector.load %arg4[%c3, %c0_38, %c0_39] : memref<9x128x128xf32, #tpu.memory_space<vmem>>, vector<1x128x128xf32>
    %68 = vector.shape_cast %67 : vector<1x128x128xf32> to vector<128x128xf32>
    %cst_40 = arith.constant dense<0.000000e+00> : vector<64x128xf32>
    %69 = tpu.matmul %66, %68, %cst_40 {dimension_numbers = #tpu.dot_dimension_numbers<[1], [0], [0], [1], [0, 0, 1, 1], [], []>} : vector<64x128xf32>, vector<128x128xf32>, vector<64x128xf32> -> vector<64x128xf32>
    %70 = arith.addf %59, %69 : vector<64x128xf32>
    %c9_41 = arith.constant 9 : index
    %c0_42 = arith.constant 0 : index
    %71 = vector.load %arg8[%c9_41, %c0_42] : memref<88x128xf32, #tpu.memory_space<vmem>>, vector<64x128xf32>
    %c4 = arith.constant 4 : index
    %c0_43 = arith.constant 0 : index
    %c0_44 = arith.constant 0 : index
    %72 = vector.load %arg4[%c4, %c0_43, %c0_44] : memref<9x128x128xf32, #tpu.memory_space<vmem>>, vector<1x128x128xf32>
    %73 = vector.shape_cast %72 : vector<1x128x128xf32> to vector<128x128xf32>
    %cst_45 = arith.constant dense<0.000000e+00> : vector<64x128xf32>
    %74 = tpu.matmul %71, %73, %cst_45 {dimension_numbers = #tpu.dot_dimension_numbers<[1], [0], [0], [1], [0, 0, 1, 1], [], []>} : vector<64x128xf32>, vector<128x128xf32>, vector<64x128xf32> -> vector<64x128xf32>
    %75 = arith.addf %70, %74 : vector<64x128xf32>
    %c10 = arith.constant 10 : index
    %c0_46 = arith.constant 0 : index
    %76 = vector.load %arg8[%c10, %c0_46] : memref<88x128xf32, #tpu.memory_space<vmem>>, vector<64x128xf32>
    %c7_i32_47 = arith.constant 7 : i32
    %77 = vector.broadcast %c7_i32_47 : i32 to vector<64x1xi32>
    %78 = arith.cmpi slt, %31, %77 : vector<64x1xi32>
    %cst_48 = arith.constant 0.000000e+00 : f32
    %79 = vector.broadcast %cst_48 : f32 to vector<64x128xf32>
    %80 = vector.shape_cast %78 : vector<64x1xi1> to vector<64x1xi1>
    %81 = vector.broadcast %80 : vector<64x1xi1> to vector<64x128xi1>
    %82 = arith.select %81, %76, %79 : vector<64x128xi1>, vector<64x128xf32>
    %c5 = arith.constant 5 : index
    %c0_49 = arith.constant 0 : index
    %c0_50 = arith.constant 0 : index
    %83 = vector.load %arg4[%c5, %c0_49, %c0_50] : memref<9x128x128xf32, #tpu.memory_space<vmem>>, vector<1x128x128xf32>
    %84 = vector.shape_cast %83 : vector<1x128x128xf32> to vector<128x128xf32>
    %cst_51 = arith.constant dense<0.000000e+00> : vector<64x128xf32>
    %85 = tpu.matmul %82, %84, %cst_51 {dimension_numbers = #tpu.dot_dimension_numbers<[1], [0], [0], [1], [0, 0, 1, 1], [], []>} : vector<64x128xf32>, vector<128x128xf32>, vector<64x128xf32> -> vector<64x128xf32>
    %86 = arith.addf %75, %85 : vector<64x128xf32>
    %c16 = arith.constant 16 : index
    %c0_52 = arith.constant 0 : index
    %87 = vector.load %arg8[%c16, %c0_52] : memref<88x128xf32, #tpu.memory_space<vmem>>, vector<64x128xf32>
    %c0_i32_53 = arith.constant 0 : i32
    %88 = vector.broadcast %c0_i32_53 : i32 to vector<64x1xi32>
    %89 = arith.cmpi sgt, %31, %88 : vector<64x1xi32>
    %cst_54 = arith.constant 0.000000e+00 : f32
    %90 = vector.broadcast %cst_54 : f32 to vector<64x128xf32>
    %91 = vector.shape_cast %89 : vector<64x1xi1> to vector<64x1xi1>
    %92 = vector.broadcast %91 : vector<64x1xi1> to vector<64x128xi1>
    %93 = arith.select %92, %87, %90 : vector<64x128xi1>, vector<64x128xf32>
    %c6 = arith.constant 6 : index
    %c0_55 = arith.constant 0 : index
    %c0_56 = arith.constant 0 : index
    %94 = vector.load %arg4[%c6, %c0_55, %c0_56] : memref<9x128x128xf32, #tpu.memory_space<vmem>>, vector<1x128x128xf32>
    %95 = vector.shape_cast %94 : vector<1x128x128xf32> to vector<128x128xf32>
    %cst_57 = arith.constant dense<0.000000e+00> : vector<64x128xf32>
    %96 = tpu.matmul %93, %95, %cst_57 {dimension_numbers = #tpu.dot_dimension_numbers<[1], [0], [0], [1], [0, 0, 1, 1], [], []>} : vector<64x128xf32>, vector<128x128xf32>, vector<64x128xf32> -> vector<64x128xf32>
    %97 = arith.addf %86, %96 : vector<64x128xf32>
    %c17 = arith.constant 17 : index
    %c0_58 = arith.constant 0 : index
    %98 = vector.load %arg8[%c17, %c0_58] : memref<88x128xf32, #tpu.memory_space<vmem>>, vector<64x128xf32>
    %c7 = arith.constant 7 : index
    %c0_59 = arith.constant 0 : index
    %c0_60 = arith.constant 0 : index
    %99 = vector.load %arg4[%c7, %c0_59, %c0_60] : memref<9x128x128xf32, #tpu.memory_space<vmem>>, vector<1x128x128xf32>
    %100 = vector.shape_cast %99 : vector<1x128x128xf32> to vector<128x128xf32>
    %cst_61 = arith.constant dense<0.000000e+00> : vector<64x128xf32>
    %101 = tpu.matmul %98, %100, %cst_61 {dimension_numbers = #tpu.dot_dimension_numbers<[1], [0], [0], [1], [0, 0, 1, 1], [], []>} : vector<64x128xf32>, vector<128x128xf32>, vector<64x128xf32> -> vector<64x128xf32>
    %102 = arith.addf %97, %101 : vector<64x128xf32>
    %c18 = arith.constant 18 : index
    %c0_62 = arith.constant 0 : index
    %103 = vector.load %arg8[%c18, %c0_62] : memref<88x128xf32, #tpu.memory_space<vmem>>, vector<64x128xf32>
    %c7_i32_63 = arith.constant 7 : i32
    %104 = vector.broadcast %c7_i32_63 : i32 to vector<64x1xi32>
    %105 = arith.cmpi slt, %31, %104 : vector<64x1xi32>
    %cst_64 = arith.constant 0.000000e+00 : f32
    %106 = vector.broadcast %cst_64 : f32 to vector<64x128xf32>
    %107 = vector.shape_cast %105 : vector<64x1xi1> to vector<64x1xi1>
    %108 = vector.broadcast %107 : vector<64x1xi1> to vector<64x128xi1>
    %109 = arith.select %108, %103, %106 : vector<64x128xi1>, vector<64x128xf32>
    %c8_65 = arith.constant 8 : index
    %c0_66 = arith.constant 0 : index
    %c0_67 = arith.constant 0 : index
    %110 = vector.load %arg4[%c8_65, %c0_66, %c0_67] : memref<9x128x128xf32, #tpu.memory_space<vmem>>, vector<1x128x128xf32>
    %111 = vector.shape_cast %110 : vector<1x128x128xf32> to vector<128x128xf32>
    %cst_68 = arith.constant dense<0.000000e+00> : vector<64x128xf32>
    %112 = tpu.matmul %109, %111, %cst_68 {dimension_numbers = #tpu.dot_dimension_numbers<[1], [0], [0], [1], [0, 0, 1, 1], [], []>} : vector<64x128xf32>, vector<128x128xf32>, vector<64x128xf32> -> vector<64x128xf32>
    %113 = arith.addf %102, %112 : vector<64x128xf32>
    %c0_69 = arith.constant 0 : index
    %c0_70 = arith.constant 0 : index
    %c0_71 = arith.constant 0 : index
    %114 = vector.load %arg5[%c0_69, %c0_70, %c0_71] : memref<1x64x128xf32, #tpu.memory_space<vmem>>, vector<1x64x128xf32>
    %115 = vector.shape_cast %114 : vector<1x64x128xf32> to vector<64x128xf32>
    %116 = vector.shape_cast %113 : vector<64x128xf32> to vector<1x64x128xf32>
    tpu.vector_store %arg5[%c0_69, %c0_70, %c0_71], %116 {strides = array<i32>} : memref<1x64x128xf32, #tpu.memory_space<vmem>>, vector<1x64x128xf32>,
    %cst_72 = arith.constant dense<0.000000e+00> : vector<128xf32>
    %117 = vector.multi_reduction <add>, %113, %cst_72 [0] : vector<64x128xf32> to vector<128xf32>
    %118 = vector.shape_cast %117 : vector<128xf32> to vector<1x128xf32>
    %c0_73 = arith.constant 0 : index
    %c0_74 = arith.constant 0 : index
    %c0_75 = arith.constant 0 : index
    %119 = vector.load %arg6[%c0_73, %c0_74, %c0_75] : memref<1x1x128xf32, #tpu.memory_space<vmem>>, vector<1x1x128xf32>
    %120 = vector.shape_cast %119 : vector<1x1x128xf32> to vector<1x128xf32>
    %121 = vector.shape_cast %118 : vector<1x128xf32> to vector<1x1x128xf32>
    tpu.vector_store %arg6[%c0_73, %c0_74, %c0_75], %121 {strides = array<i32>} : memref<1x1x128xf32, #tpu.memory_space<vmem>>, vector<1x1x128xf32>,
    %122 = arith.mulf %113, %113 : vector<64x128xf32>
    %cst_76 = arith.constant dense<0.000000e+00> : vector<128xf32>
    %123 = vector.multi_reduction <add>, %122, %cst_76 [0] : vector<64x128xf32> to vector<128xf32>
    %124 = vector.shape_cast %123 : vector<128xf32> to vector<1x128xf32>
    %c0_77 = arith.constant 0 : index
    %c0_78 = arith.constant 0 : index
    %c0_79 = arith.constant 0 : index
    %125 = vector.load %arg7[%c0_77, %c0_78, %c0_79] : memref<1x1x128xf32, #tpu.memory_space<vmem>>, vector<1x1x128xf32>
    %126 = vector.shape_cast %125 : vector<1x1x128xf32> to vector<1x128xf32>
    %127 = vector.shape_cast %124 : vector<1x128xf32> to vector<1x1x128xf32>
    tpu.vector_store %arg7[%c0_77, %c0_78, %c0_79], %127 {strides = array<i32>} : memref<1x1x128xf32, #tpu.memory_space<vmem>>, vector<1x1x128xf32>,
    return
  }
  func.func @transform_0(%arg0: i32) -> (i32, i32, i32) {
    %c0_i32 = arith.constant 0 : i32
    %c0_i32_0 = arith.constant 0 : i32
    %c0_i32_1 = arith.constant 0 : i32
    return %arg0, %c0_i32, %c0_i32_0 : i32, i32, i32
  }
  func.func @transform_1(%arg0: i32) -> (i32, i32) {
    %c0_i32 = arith.constant 0 : i32
    %c0_i32_0 = arith.constant 0 : i32
    %c0_i32_1 = arith.constant 0 : i32
    return %c0_i32, %c0_i32_0 : i32, i32
  }
  func.func @transform_2(%arg0: i32) -> (i32, i32) {
    %c0_i32 = arith.constant 0 : i32
    %c0_i32_0 = arith.constant 0 : i32
    %c0_i32_1 = arith.constant 0 : i32
    return %c0_i32, %c0_i32_0 : i32, i32
  }
  func.func @transform_3(%arg0: i32) -> (i32, i32, i32) {
    %c0_i32 = arith.constant 0 : i32
    %c0_i32_0 = arith.constant 0 : i32
    %c0_i32_1 = arith.constant 0 : i32
    %c0_i32_2 = arith.constant 0 : i32
    return %c0_i32, %c0_i32_0, %c0_i32_1 : i32, i32, i32
  }
  func.func @transform_4(%arg0: i32) -> (i32, i32, i32) {
    %c0_i32 = arith.constant 0 : i32
    %c0_i32_0 = arith.constant 0 : i32
    %c0_i32_1 = arith.constant 0 : i32
    return %arg0, %c0_i32, %c0_i32_0 : i32, i32, i32
  }
  func.func @transform_5(%arg0: i32) -> (i32, i32, i32) {
    %c0_i32 = arith.constant 0 : i32
    %c0_i32_0 = arith.constant 0 : i32
    %c0_i32_1 = arith.constant 0 : i32
    return %arg0, %c0_i32, %c0_i32_0 : i32, i32, i32
  }
  func.func @transform_6(%arg0: i32) -> (i32, i32, i32) {
    %c0_i32 = arith.constant 0 : i32
    %c0_i32_0 = arith.constant 0 : i32
    %c0_i32_1 = arith.constant 0 : i32
    return %arg0, %c0_i32, %c0_i32_0 : i32, i32, i32
  }
}

module attributes {stable_mosaic.version = 11 : i64} {
  func.func @_finalize_kernel(%arg0: i32, %arg1: memref<1x64x128xf32, #tpu.memory_space<vmem>>, %arg2: memref<1x128xf32, #tpu.memory_space<vmem>>, %arg3: memref<1x128xf32, #tpu.memory_space<vmem>>, %arg4: memref<1x64x4xf32, #tpu.memory_space<vmem>>, %arg5: memref<4x128xf32, #tpu.memory_space<vmem>>, %arg6: memref<1x128xf32, #tpu.memory_space<vmem>>, %arg7: memref<1x64x128xf32, #tpu.memory_space<vmem>>) attributes {dimension_semantics = [#tpu.dimension_semantics<parallel>], iteration_bounds = array<i64: 2>, scalar_prefetch = 0 : i64, scratch_operands = 0 : i64, tpu.core_type = #tpu.core_type<tc>, window_params = [{transform_indices = @transform_0, window_bounds = array<i64: 1, 64, 128>}, {pipeline_mode = #tpu.pipeline_mode<synchronous>, transform_indices = @transform_1, window_bounds = array<i64: 1, 128>}, {pipeline_mode = #tpu.pipeline_mode<synchronous>, transform_indices = @transform_2, window_bounds = array<i64: 1, 128>}, {transform_indices = @transform_3, window_bounds = array<i64: 1, 64, 4>}, {pipeline_mode = #tpu.pipeline_mode<synchronous>, transform_indices = @transform_4, window_bounds = array<i64: 4, 128>}, {pipeline_mode = #tpu.pipeline_mode<synchronous>, transform_indices = @transform_5, window_bounds = array<i64: 1, 128>}, {transform_indices = @transform_6, window_bounds = array<i64: 1, 64, 128>}]} {
    %c0 = arith.constant 0 : index
    %c0_0 = arith.constant 0 : index
    %c0_1 = arith.constant 0 : index
    %0 = vector.load %arg1[%c0, %c0_0, %c0_1] : memref<1x64x128xf32, #tpu.memory_space<vmem>>, vector<1x64x128xf32>
    %1 = vector.shape_cast %0 : vector<1x64x128xf32> to vector<64x128xf32>
    %c0_2 = arith.constant 0 : index
    %c0_3 = arith.constant 0 : index
    %2 = vector.load %arg2[%c0_2, %c0_3] : memref<1x128xf32, #tpu.memory_space<vmem>>, vector<1x128xf32>
    %3 = vector.broadcast %2 : vector<1x128xf32> to vector<64x128xf32>
    %4 = arith.mulf %1, %3 : vector<64x128xf32>
    %c0_4 = arith.constant 0 : index
    %c0_5 = arith.constant 0 : index
    %5 = vector.load %arg3[%c0_4, %c0_5] : memref<1x128xf32, #tpu.memory_space<vmem>>, vector<1x128xf32>
    %6 = vector.broadcast %5 : vector<1x128xf32> to vector<64x128xf32>
    %7 = arith.addf %4, %6 : vector<64x128xf32>
    %c0_6 = arith.constant 0 : index
    %c0_7 = arith.constant 0 : index
    %c0_8 = arith.constant 0 : index
    %8 = vector.load %arg4[%c0_6, %c0_7, %c0_8] : memref<1x64x4xf32, #tpu.memory_space<vmem>>, vector<1x64x4xf32>
    %9 = vector.shape_cast %8 : vector<1x64x4xf32> to vector<64x4xf32>
    %c0_9 = arith.constant 0 : index
    %c0_10 = arith.constant 0 : index
    %10 = vector.load %arg5[%c0_9, %c0_10] : memref<4x128xf32, #tpu.memory_space<vmem>>, vector<4x128xf32>
    %cst = arith.constant dense<0.000000e+00> : vector<64x128xf32>
    %11 = tpu.matmul %9, %10, %cst {dimension_numbers = #tpu.dot_dimension_numbers<[1], [0], [0], [1], [0, 0, 1, 1], [], []>} : vector<64x4xf32>, vector<4x128xf32>, vector<64x128xf32> -> vector<64x128xf32>
    %c0_11 = arith.constant 0 : index
    %c0_12 = arith.constant 0 : index
    %12 = vector.load %arg6[%c0_11, %c0_12] : memref<1x128xf32, #tpu.memory_space<vmem>>, vector<1x128xf32>
    %13 = vector.broadcast %12 : vector<1x128xf32> to vector<64x128xf32>
    %14 = arith.addf %11, %13 : vector<64x128xf32>
    %15 = arith.addf %7, %14 : vector<64x128xf32>
    %cst_13 = arith.constant 0.000000e+00 : f32
    %16 = vector.broadcast %cst_13 : f32 to vector<64x128xf32>
    %17 = arith.maximumf %15, %16 : vector<64x128xf32>
    %c0_14 = arith.constant 0 : index
    %c0_15 = arith.constant 0 : index
    %c0_16 = arith.constant 0 : index
    %18 = vector.load %arg7[%c0_14, %c0_15, %c0_16] : memref<1x64x128xf32, #tpu.memory_space<vmem>>, vector<1x64x128xf32>
    %19 = vector.shape_cast %18 : vector<1x64x128xf32> to vector<64x128xf32>
    %20 = vector.shape_cast %17 : vector<64x128xf32> to vector<1x64x128xf32>
    tpu.vector_store %arg7[%c0_14, %c0_15, %c0_16], %20 {strides = array<i32>} : memref<1x64x128xf32, #tpu.memory_space<vmem>>, vector<1x64x128xf32>,
    return
  }
  func.func @transform_0(%arg0: i32) -> (i32, i32, i32) {
    %c0_i32 = arith.constant 0 : i32
    %c0_i32_0 = arith.constant 0 : i32
    %c0_i32_1 = arith.constant 0 : i32
    return %arg0, %c0_i32, %c0_i32_0 : i32, i32, i32
  }
  func.func @transform_1(%arg0: i32) -> (i32, i32) {
    %c0_i32 = arith.constant 0 : i32
    %c0_i32_0 = arith.constant 0 : i32
    %c0_i32_1 = arith.constant 0 : i32
    return %c0_i32, %c0_i32_0 : i32, i32
  }
  func.func @transform_2(%arg0: i32) -> (i32, i32) {
    %c0_i32 = arith.constant 0 : i32
    %c0_i32_0 = arith.constant 0 : i32
    %c0_i32_1 = arith.constant 0 : i32
    return %c0_i32, %c0_i32_0 : i32, i32
  }
  func.func @transform_3(%arg0: i32) -> (i32, i32, i32) {
    %c0_i32 = arith.constant 0 : i32
    %c0_i32_0 = arith.constant 0 : i32
    %c0_i32_1 = arith.constant 0 : i32
    return %arg0, %c0_i32, %c0_i32_0 : i32, i32, i32
  }
  func.func @transform_4(%arg0: i32) -> (i32, i32) {
    %c0_i32 = arith.constant 0 : i32
    %c0_i32_0 = arith.constant 0 : i32
    %c0_i32_1 = arith.constant 0 : i32
    return %c0_i32, %c0_i32_0 : i32, i32
  }
  func.func @transform_5(%arg0: i32) -> (i32, i32) {
    %c0_i32 = arith.constant 0 : i32
    %c0_i32_0 = arith.constant 0 : i32
    %c0_i32_1 = arith.constant 0 : i32
    return %c0_i32, %c0_i32_0 : i32, i32
  }
  func.func @transform_6(%arg0: i32) -> (i32, i32, i32) {
    %c0_i32 = arith.constant 0 : i32
    %c0_i32_0 = arith.constant 0 : i32
    %c0_i32_1 = arith.constant 0 : i32
    return %arg0, %c0_i32, %c0_i32_0 : i32, i32, i32
  }
}

</mosaic_0001>

<llo_original>
// kernel: residual_forward.5
$region0: #{residual_forward.5}
  #allocation0 [shape = 'u32[]', space=smem, size = 0x4, offset = 0x4, fixed_abs, tag = 'smem constant byte address 0x4 - core index']
  #allocation1 [shape = 'u32[72,128]{1,0:T(1,128)}', space=vmem, size = 0x9000, scoped, tag = 'internal scratch']
  %s0 = inlined_call_operand.vmem [shape: f32[2,64,128], index: 0, kind: input, shape index: {}]
  %s1 = inlined_call_operand.vmem [shape: f32[1,128], index: 1, kind: input, shape index: {}]
  %s2 = inlined_call_operand.vmem [shape: f32[1,128], index: 2, kind: input, shape index: {}]
  %s3 = inlined_call_operand.vmem [shape: f32[2,64,4], index: 3, kind: input, shape index: {}]
  %s4 = inlined_call_operand.vmem [shape: f32[4,128], index: 4, kind: input, shape index: {}]
  %s5 = inlined_call_operand.vmem [shape: f32[1,128], index: 5, kind: input, shape index: {}]
  %s6 = inlined_call_operand.vmem [shape: f32[2,64,128], index: 6, kind: output, shape index: {}]
  %s7 = sld [smem:[#allocation0]]
  $region57: #{residual_forward.5} parent=0
    _
  %s9 = ssub.s32 1, %s7
  %s10 = scalar_select 0, %s9, %s7
  loop: start=0, step=1, limit=4
  $region2: #{residual_forward.5} parent=0 // loop_pre_header
    _
  $region3: #{residual_forward.5} parent=0 // loop_header
    %s12 = sphi 0, %s16
    %p13 = scmp.ge.s32.totalorder %s12, 4
    %s22 = sphi 0, %s24
    %s25 = sphi 0, %s22
    %s26 = sphi 0, %s25
    %s42 = sphi 0, %s26
    %s46 = sphi 0, %s46
    %s48 = sphi 0, %s46
    %s49 = sphi 0, %s48
    %s63 = sphi 0, %s49
    %s67 = sphi 0, %s67
    %s69 = sphi 0, %s67
    %s70 = sphi 0, %s69
    %s84 = sphi 0, %s70
    %s90 = sphi 0, %s92
    %s93 = sphi 0, %s90
    %s94 = sphi 0, %s93
    %s110 = sphi 0, %s94
    %s114 = sphi 0, %s114
    %s116 = sphi 0, %s114
    %s117 = sphi 0, %s116
    %s131 = sphi 0, %s117
    %s135 = sphi 0, %s135
    %s137 = sphi 0, %s135
    %s138 = sphi 0, %s137
    %s152 = sphi 0, %s138
    %s158 = sphi 0, %s160
    %s161 = sphi 0, %s158
    %s162 = sphi 0, %s161
    %s178 = sphi 0, %s162
  $region4: #{residual_forward.5} parent=0 // loop_header_branch
    %15 = sbr.rel (%p13) target = $region8
  $region5: #{residual_forward.5} parent=0 // loop_body
    %s17 = ssub.s32 %s12, 1
    %s18 = ssub.s32 %s12, 2
    %s19 = sadd.s32 %s12, 1
    %s20 = ssub.s32 %s12, %s19
    %p21 = scmp.eq.s32.totalorder %s20, 0
    %s23 = sadd.s32 %s22, 1
    %s24 = scalar_select %p21, %s22, %s23
    %p27 = pneg %p21
    %p28 = scmp.eq.s32.totalorder %s12, 1
    %p29 = por %p27, %p28
    %p30 = scmp.ne.s32.totalorder %s22, %s25
    %p31 = scmp.eq.s32.totalorder %s12, 0
    %p32 = por %p30, %p31
    %p33 = scmp.ne.s32.totalorder %s22, %s25
    %p34 = scmp.eq.s32.totalorder %s17, 1
    %p35 = por %p33, %p34
    %p36 = scmp.ne.s32.totalorder %s25, %s26
    %p37 = scmp.eq.s32.totalorder %s17, 0
    %p38 = por %p36, %p37
    %p39 = scmp.ne.s32.totalorder %s25, %s26
    %p40 = scmp.eq.s32.totalorder %s18, 1
    %p41 = por %p39, %p40
    %p43 = scmp.ne.s32.totalorder %s26, %s42
    %p44 = scmp.eq.s32.totalorder %s18, 0
    %p45 = por %p43, %p44
    %s47 = sadd.s32 %s46, 1
    %p50 = scmp.eq.s32.totalorder %s12, 1
    %p51 = scmp.ne.s32.totalorder %s46, %s48
    %p52 = scmp.eq.s32.totalorder %s12, 0
    %p53 = por %p51, %p52
    %p54 = scmp.ne.s32.totalorder %s46, %s48
    %p55 = scmp.eq.s32.totalorder %s17, 1
    %p56 = por %p54, %p55
    %p57 = scmp.ne.s32.totalorder %s48, %s49
    %p58 = scmp.eq.s32.totalorder %s17, 0
    %p59 = por %p57, %p58
    %p60 = scmp.ne.s32.totalorder %s48, %s49
    %p61 = scmp.eq.s32.totalorder %s18, 1
    %p62 = por %p60, %p61
    %p64 = scmp.ne.s32.totalorder %s49, %s63
    %p65 = scmp.eq.s32.totalorder %s18, 0
    %p66 = por %p64, %p65
    %s68 = sadd.s32 %s67, 1
    %p71 = scmp.eq.s32.totalorder %s12, 1
    %p72 = scmp.ne.s32.totalorder %s67, %s69
    %p73 = scmp.eq.s32.totalorder %s12, 0
    %p74 = por %p72, %p73
    %p75 = scmp.ne.s32.totalorder %s67, %s69
    %p76 = scmp.eq.s32.totalorder %s17, 1
    %p77 = por %p75, %p76
    %p78 = scmp.ne.s32.totalorder %s69, %s70
    %p79 = scmp.eq.s32.totalorder %s17, 0
    %p80 = por %p78, %p79
    %p81 = scmp.ne.s32.totalorder %s69, %s70
    %p82 = scmp.eq.s32.totalorder %s18, 1
    %p83 = por %p81, %p82
    %p85 = scmp.ne.s32.totalorder %s70, %s84
    %p86 = scmp.eq.s32.totalorder %s18, 0
    %p87 = por %p85, %p86
    %s88 = ssub.s32 %s12, %s19
    %p89 = scmp.eq.s32.totalorder %s88, 0
    %s91 = sadd.s32 %s90, 1
    %s92 = scalar_select %p89, %s90, %s91
    %p95 = pneg %p89
    %p96 = scmp.eq.s32.totalorder %s12, 1
    %p97 = por %p95, %p96
    %p98 = scmp.ne.s32.totalorder %s90, %s93
    %p99 = scmp.eq.s32.totalorder %s12, 0
    %p100 = por %p98, %p99
    %p101 = scmp.ne.s32.totalorder %s90, %s93
    %p102 = scmp.eq.s32.totalorder %s17, 1
    %p103 = por %p101, %p102
    %p104 = scmp.ne.s32.totalorder %s93, %s94
    %p105 = scmp.eq.s32.totalorder %s17, 0
    %p106 = por %p104, %p105
    %p107 = scmp.ne.s32.totalorder %s93, %s94
    %p108 = scmp.eq.s32.totalorder %s18, 1
    %p109 = por %p107, %p108
    %p111 = scmp.ne.s32.totalorder %s94, %s110
    %p112 = scmp.eq.s32.totalorder %s18, 0
    %p113 = por %p111, %p112
    %s115 = sadd.s32 %s114, 1
    %p118 = scmp.eq.s32.totalorder %s12, 1
    %p119 = scmp.ne.s32.totalorder %s114, %s116
    %p120 = scmp.eq.s32.totalorder %s12, 0
    %p121 = por %p119, %p120
    %p122 = scmp.ne.s32.totalorder %s114, %s116
    %p123 = scmp.eq.s32.totalorder %s17, 1
    %p124 = por %p122, %p123
    %p125 = scmp.ne.s32.totalorder %s116, %s117
    %p126 = scmp.eq.s32.totalorder %s17, 0
    %p127 = por %p125, %p126
    %p128 = scmp.ne.s32.totalorder %s116, %s117
    %p129 = scmp.eq.s32.totalorder %s18, 1
    %p130 = por %p128, %p129
    %p132 = scmp.ne.s32.totalorder %s117, %s131
    %p133 = scmp.eq.s32.totalorder %s18, 0
    %p134 = por %p132, %p133
    %s136 = sadd.s32 %s135, 1
    %p139 = scmp.eq.s32.totalorder %s12, 1
    %p140 = scmp.ne.s32.totalorder %s135, %s137
    %p141 = scmp.eq.s32.totalorder %s12, 0
    %p142 = por %p140, %p141
    %p143 = scmp.ne.s32.totalorder %s135, %s137
    %p144 = scmp.eq.s32.totalorder %s17, 1
    %p145 = por %p143, %p144
    %p146 = scmp.ne.s32.totalorder %s137, %s138
    %p147 = scmp.eq.s32.totalorder %s17, 0
    %p148 = por %p146, %p147
    %p149 = scmp.ne.s32.totalorder %s137, %s138
    %p150 = scmp.eq.s32.totalorder %s18, 1
    %p151 = por %p149, %p150
    %p153 = scmp.ne.s32.totalorder %s138, %s152
    %p154 = scmp.eq.s32.totalorder %s18, 0
    %p155 = por %p153, %p154
    %s156 = ssub.s32 %s12, %s19
    %p157 = scmp.eq.s32.totalorder %s156, 0
    %s159 = sadd.s32 %s158, 1
    %s160 = scalar_select %p157, %s158, %s159
    %p163 = pneg %p157
    %p164 = scmp.eq.s32.totalorder %s12, 1
    %p165 = por %p163, %p164
    %p166 = scmp.ne.s32.totalorder %s158, %s161
    %p167 = scmp.eq.s32.totalorder %s12, 0
    %p168 = por %p166, %p167
    %p169 = scmp.ne.s32.totalorder %s158, %s161
    %p170 = scmp.eq.s32.totalorder %s17, 1
    %p171 = por %p169, %p170
    %p172 = scmp.ne.s32.totalorder %s161, %s162
    %p173 = scmp.eq.s32.totalorder %s17, 0
    %p174 = por %p172, %p173
    %p175 = scmp.ne.s32.totalorder %s161, %s162
    %p176 = scmp.eq.s32.totalorder %s18, 1
    %p177 = por %p175, %p176
    %p179 = scmp.ne.s32.totalorder %s162, %s178
    %p180 = scmp.eq.s32.totalorder %s18, 0
    %p181 = por %p179, %p180
    %p182 = scmp.le.s32.totalorder 1, %s12
    %p183 = scmp.lt.s32.totalorder %s12, 3
    %p184 = pnand %p182, %p183
    %p185 = pneg %p184
    // Predicated region
    $region9: #{residual_forward.5} parent=5 // pred_check
      _
    $region10: #{residual_forward.5} parent=5 // pred_check_branch
      %187 = sbr.rel (%p184) target = $region12
    $region11: #{residual_forward.5} parent=5 // pred_region
      %s188 = ssub.s32 %s12, 1
      // Predicated region
      $region13: #{residual_forward.5} parent=11 // pred_check
        %p189 = pneg %p59
      $region14: #{residual_forward.5} parent=11 // pred_check_branch
        %191 = sbr.rel (%p189) target = $region16
      $region15: #{residual_forward.5} parent=11 // pred_region
        _
      $region16: #{residual_forward.5} parent=11 // pred_fallthru
        _
      // Predicated region
      $region17: #{residual_forward.5} parent=11 // pred_check
        %p192 = pneg %p80
      $region18: #{residual_forward.5} parent=11 // pred_check_branch
        %194 = sbr.rel (%p192) target = $region20
      $region19: #{residual_forward.5} parent=11 // pred_region
        _
      $region20: #{residual_forward.5} parent=11 // pred_fallthru
        _
      // Predicated region
      $region21: #{residual_forward.5} parent=11 // pred_check
        %p195 = pneg %p127
      $region22: #{residual_forward.5} parent=11 // pred_check_branch
        %197 = sbr.rel (%p195) target = $region24
      $region23: #{residual_forward.5} parent=11 // pred_region
        _
      $region24: #{residual_forward.5} parent=11 // pred_fallthru
        _
      // Predicated region
      $region25: #{residual_forward.5} parent=11 // pred_check
        %p198 = pneg %p148
      $region26: #{residual_forward.5} parent=11 // pred_check_branch
        %200 = sbr.rel (%p198) target = $region28
      $region27: #{residual_forward.5} parent=11 // pred_region
        _
      $region28: #{residual_forward.5} parent=11 // pred_fallthru
        _
    $region12: #{residual_forward.5} parent=5 // pred_fallthru
      _
    %p201 = scmp.lt.s32.totalorder %s12, 2
    // Predicated region
    $region29: #{residual_forward.5} parent=5 // pred_check
      %p202 = pneg %p201
    $region30: #{residual_forward.5} parent=5 // pred_check_branch
      %204 = sbr.rel (%p202) target = $region32
    $region31: #{residual_forward.5} parent=5 // pred_region
      // Predicated region
      $region33: #{residual_forward.5} parent=31 // pred_check
        %p205 = pneg %p32
      $region34: #{residual_forward.5} parent=31 // pred_check_branch
        %207 = sbr.rel (%p205) target = $region36
      $region35: #{residual_forward.5} parent=31 // pred_region
        %p208 = scmp.lt.s32.totalorder %s12, 1
        %s209 = scalar_select %p208, %s12, 1
        %s210 = smul.addr %s209, 8
        %s211 = smul.addr %s210, 8
        %s212 = scalar_lea.vmem %s0, %s211
      $region36: #{residual_forward.5} parent=31 // pred_fallthru
        _
      // Predicated region
      $region37: #{residual_forward.5} parent=31 // pred_check
        %p213 = pneg %p100
      $region38: #{residual_forward.5} parent=31 // pred_check_branch
        %215 = sbr.rel (%p213) target = $region40
      $region39: #{residual_forward.5} parent=31 // pred_region
        %p216 = scmp.lt.s32.totalorder %s12, 1
        %s217 = scalar_select %p216, %s12, 1
        %s218 = smul.addr %s217, 8
        %s219 = smul.addr %s218, 8
        %s220 = scalar_lea.vmem %s3, %s219
      $region40: #{residual_forward.5} parent=31 // pred_fallthru
        _
    $region32: #{residual_forward.5} parent=5 // pred_fallthru
      _
    %p221 = scmp.le.s32.totalorder 1, %s12
    %p222 = scmp.lt.s32.totalorder %s12, 3
    %p223 = pnand %p221, %p222
    %p224 = pneg %p223
    // Predicated region
    $region41: #{residual_forward.5} parent=5 // pred_check
      _
    $region42: #{residual_forward.5} parent=5 // pred_check_branch
      %226 = sbr.rel (%p223) target = $region44
    $region43: #{residual_forward.5} parent=5 // pred_region
      %s227 = ssub.s32 %s12, 1
      %p228 = scmp.lt.s32.totalorder %s17, 1
      %s229 = scalar_select %p228, %s17, 1
      %s230 = smul.addr %s229, 8
      %s231 = smul.addr %s230, 8
      %s232 = scalar_lea.vmem %s0, %s231
      %p233 = pneg %p38
      %p234 = pneg %p35
      %p235 = pneg %p59
      %p236 = pneg %p56
      %p237 = pneg %p80
      %p238 = pneg %p77
      %p239 = scmp.lt.s32.totalorder %s17, 1
      %s240 = scalar_select %p239, %s17, 1
      %s241 = smul.addr %s240, 8
      %s242 = smul.addr %s241, 8
      %s243 = scalar_lea.vmem %s3, %s242
      %p244 = pneg %p106
      %p245 = pneg %p103
      %p246 = pneg %p127
      %p247 = pneg %p124
      %p248 = pneg %p148
      %p249 = pneg %p145
      %p250 = pneg %p174
      %p251 = pneg %p171
      %p252 = scmp.lt.s32.totalorder %s17, 1
      %s253 = scalar_select %p252, %s17, 1
      %s254 = smul.addr %s253, 8
      %s255 = smul.addr %s254, 8
      %s256 = scalar_lea.vmem %s6, %s255
      %p257 = scmp.lt.s32.totalorder %s17, 1
      %s258 = scalar_select %p257, %s17, 1
      %s259 = smul.addr %s258, 8
      %s260 = smul.addr %s259, 8
      %s261 = scalar_lea.vmem %s0, %s260
      %p262 = scmp.lt.s32.totalorder %s17, 1
      %s263 = scalar_select %p262, %s17, 1
      %s264 = smul.addr %s263, 8
      %s265 = smul.addr %s264, 8
      %s266 = scalar_lea.vmem %s3, %s265
      %p267 = scmp.lt.s32.totalorder %s17, 1
      %s268 = scalar_select %p267, %s17, 1
      %s269 = smul.addr %s268, 8
      %s270 = smul.addr %s269, 8
      %s271 = scalar_lea.vmem %s6, %s270
      %v272 = vld [vmem:[%s261] sm:$0xff]
      %v273 = vld [vmem:[%s261 + $0x8] sm:$0xff]
      %v274 = vld [vmem:[%s261 + $0x10] sm:$0xff]
      %v275 = vld [vmem:[%s261 + $0x18] sm:$0xff]
      %v276 = vld [vmem:[%s261 + $0x20] sm:$0xff]
      %v277 = vld [vmem:[%s261 + $0x28] sm:$0xff]
      %v278 = vld [vmem:[%s261 + $0x30] sm:$0xff]
      %v279 = vld [vmem:[%s261 + $0x38] sm:$0xff]
      %v280 = vld [vmem:[%s1] sm:$0x1]
      %v282 = vperm.slane %v280, 0
      %v284 = vmul.f32 %v272, %v282
      %v285 = vmul.f32 %v273, %v282
      %v286 = vmul.f32 %v274, %v282
      %v287 = vmul.f32 %v275, %v282
      %v288 = vmul.f32 %v276, %v282
      %v289 = vmul.f32 %v277, %v282
      %v290 = vmul.f32 %v278, %v282
      %v291 = vmul.f32 %v279, %v282
      %v292 = vld [vmem:[%s2] sm:$0x1]
      %v294 = vperm.slane %v292, 0
      %v296 = vadd.f32 %v284, %v294
      %v297 = vadd.f32 %v285, %v294
      %v298 = vadd.f32 %v286, %v294
      %v299 = vadd.f32 %v287, %v294
      %v300 = vadd.f32 %v288, %v294
      %v301 = vadd.f32 %v289, %v294
      %v302 = vadd.f32 %v290, %v294
      %v303 = vadd.f32 %v291, %v294
      %v304 = vld [vmem:[%s266] sm:$0xff]
      %v305 = vld [vmem:[%s266 + $0x8] sm:$0xff]
      %v306 = vld [vmem:[%s266 + $0x10] sm:$0xff]
      %v307 = vld [vmem:[%s266 + $0x18] sm:$0xff]
      %v308 = vld [vmem:[%s266 + $0x20] sm:$0xff]
      %v309 = vld [vmem:[%s266 + $0x28] sm:$0xff]
      %v310 = vld [vmem:[%s266 + $0x30] sm:$0xff]
      %v311 = vld [vmem:[%s266 + $0x38] sm:$0xff]
      %v312 = vld [vmem:[%s4] sm:$0xf]
      %v313 = vld [vmem:[%s5] sm:$0x1]
      %v315 = vperm.slane %v313, 0
      %vm317 = vcmask 31744
      %v319 = vsel %vm317, %v304, 0
      %v322 = vsel %vm317, %v305, 0
      %v325 = vsel %vm317, %v306, 0
      %v328 = vsel %vm317, %v307, 0
      %v331 = vsel %vm317, %v308, 0
      %v334 = vsel %vm317, %v309, 0
      %v337 = vsel %vm317, %v310, 0
      %v340 = vsel %vm317, %v311, 0
      %vm342 = vcmask 1043456
      %v344 = vsel %vm342, %v312, 0
      %346 = vmatpush.msra.mxu0 0.0
      %347 = vmatpush.msra.mxu0 0.0
      %348 = vmatpush.msra.mxu0 0.0
      %349 = vmatpush.msra.mxu0 0.0
      %350 = vmatpush.msra.mxu0 0.0
      %351 = vmatpush.msra.mxu0 0.0
      %352 = vmatpush.msra.mxu0 0.0
      %353 = vmatpush.msra.mxu0 0.0
      %354 = vmatpush.msra.mxu0 0.0
      %355 = vmatpush.msra.mxu0 0.0
      %356 = vmatpush.msra.mxu0 0.0
      %357 = vmatpush.msra.mxu0 0.0
      %358 = vmatpush.msra.mxu0 0.0
      %359 = vmatpush.msra.mxu0 0.0
      %360 = vmatpush.msra.mxu0 0.0
      %361 = vmatpush.msra.mxu0 %v344
      %362 = vmatmul.f32.gmra.mxu0 %v319
      %v363 = vpop.f32.mrf.mxu0
      %v364 = vadd.f32 %v315, %v363
      %365 = vmatmul.f32.gmra.mxu0 %v322
      %v366 = vpop.f32.mrf.mxu0
      %v367 = vadd.f32 %v315, %v366
      %368 = vmatmul.f32.gmra.mxu0 %v325
      %v369 = vpop.f32.mrf.mxu0
      %v370 = vadd.f32 %v315, %v369
      %371 = vmatmul.f32.gmra.mxu0 %v328
      %v372 = vpop.f32.mrf.mxu0
      %v373 = vadd.f32 %v315, %v372
      %374 = vmatmul.f32.gmra.mxu0 %v331
      %v375 = vpop.f32.mrf.mxu0
      %v376 = vadd.f32 %v315, %v375
      %377 = vmatmul.f32.gmra.mxu0 %v334
      %v378 = vpop.f32.mrf.mxu0
      %v379 = vadd.f32 %v315, %v378
      %380 = vmatmul.f32.gmra.mxu0 %v337
      %v381 = vpop.f32.mrf.mxu0
      %v382 = vadd.f32 %v315, %v381
      %383 = vmatmul.f32.gmra.mxu0 %v340
      %v384 = vpop.f32.mrf.mxu0
      %v385 = vadd.f32 %v315, %v384
      %386 = vdwg.mxu0
      %v387 = vadd.f32 %v296, %v364
      %v388 = vadd.f32 %v297, %v367
      %v389 = vadd.f32 %v298, %v370
      %v390 = vadd.f32 %v299, %v373
      %v391 = vadd.f32 %v300, %v376
      %v392 = vadd.f32 %v301, %v379
      %v393 = vadd.f32 %v302, %v382
      %v394 = vadd.f32 %v303, %v385
      %v395 = vmax.f32 %v387, 0.0
      %v396 = vmax.f32 %v388, 0.0
      %v397 = vmax.f32 %v389, 0.0
      %v398 = vmax.f32 %v390, 0.0
      %v399 = vmax.f32 %v391, 0.0
      %v400 = vmax.f32 %v392, 0.0
      %v401 = vmax.f32 %v393, 0.0
      %v402 = vmax.f32 %v394, 0.0
      %403 = vst [vmem:[%s271] sm:$0xff] %v395
      %404 = vst [vmem:[%s271 + $0x8] sm:$0xff] %v396
      %405 = vst [vmem:[%s271 + $0x10] sm:$0xff] %v397
      %406 = vst [vmem:[%s271 + $0x18] sm:$0xff] %v398
      %407 = vst [vmem:[%s271 + $0x20] sm:$0xff] %v399
      %408 = vst [vmem:[%s271 + $0x28] sm:$0xff] %v400
      %409 = vst [vmem:[%s271 + $0x30] sm:$0xff] %v401
      %410 = vst [vmem:[%s271 + $0x38] sm:$0xff] %v402
      %p411 = scmp.lt.s32.totalorder %s17, 1
      %s412 = scalar_select %p411, %s17, 1
      %s413 = smul.addr %s412, 8
      %s414 = smul.addr %s413, 8
      %s415 = scalar_lea.vmem %s6, %s414
      // Predicated region
      $region45: #{residual_forward.5} parent=43 // pred_check
        %p416 = pneg %p171
      $region46: #{residual_forward.5} parent=43 // pred_check_branch
        %418 = sbr.rel (%p416) target = $region48
      $region47: #{residual_forward.5} parent=43 // pred_region
        _
      $region48: #{residual_forward.5} parent=43 // pred_fallthru
        _
    $region44: #{residual_forward.5} parent=5 // pred_fallthru
      _
    %p419 = scmp.le.s32.totalorder 2, %s12
    // Predicated region
    $region49: #{residual_forward.5} parent=5 // pred_check
      %p420 = pneg %p419
    $region50: #{residual_forward.5} parent=5 // pred_check_branch
      %422 = sbr.rel (%p420) target = $region52
    $region51: #{residual_forward.5} parent=5 // pred_region
      %s423 = ssub.s32 %s12, 2
      // Predicated region
      $region53: #{residual_forward.5} parent=51 // pred_check
        %p424 = pneg %p177
      $region54: #{residual_forward.5} parent=51 // pred_check_branch
        %426 = sbr.rel (%p424) target = $region56
      $region55: #{residual_forward.5} parent=51 // pred_region
        %p427 = scmp.lt.s32.totalorder %s18, 1
        %s428 = scalar_select %p427, %s18, 1
        %s429 = smul.addr %s428, 8
        %s430 = smul.addr %s429, 8
        %s431 = scalar_lea.vmem %s6, %s430
      $region56: #{residual_forward.5} parent=51 // pred_fallthru
        _
    $region52: #{residual_forward.5} parent=5 // pred_fallthru
      _
  $region6: #{residual_forward.5} parent=0 // loop_footer
    %s16 = sadd.s32 1, %s12
  $region7: #{residual_forward.5} parent=0 // loop_footer_branch
    %11 = sbr.rel target = $region3
  $region8: #{residual_forward.5} parent=0 // loop_exit
    _

// kernel: residual_forward.3
$region0: #{residual_forward.3}
  #allocation0 [shape = 'u32[]', space=smem, size = 0x4, offset = 0x4, fixed_abs, tag = 'smem constant byte address 0x4 - core index']
  #allocation1 [shape = 'u32[72,128]{1,0:T(1,128)}', space=vmem, size = 0x9000, scoped, tag = 'internal scratch']
  %s0 = inlined_call_operand.vmem [shape: f32[2,64,36], index: 0, kind: input, shape index: {}]
  %s1 = inlined_call_operand.vmem [shape: f32[36,128], index: 1, kind: input, shape index: {}]
  %s2 = inlined_call_operand.vmem [shape: f32[2,64,128], index: 2, kind: output, shape index: {0}]
  %s3 = inlined_call_operand.vmem [shape: f32[2,1,128], index: 3, kind: output, shape index: {1}]
  %s4 = inlined_call_operand.vmem [shape: f32[2,1,128], index: 4, kind: output, shape index: {2}]
  %5 = xla_tuple %s2, %s3, %s4
  %s6 = sld [smem:[#allocation0]]
  $region57: #{residual_forward.3} parent=0
    _
  %s8 = ssub.s32 1, %s6
  %s9 = scalar_select 0, %s8, %s6
  loop: start=0, step=1, limit=4
  $region2: #{residual_forward.3} parent=0 // loop_pre_header
    _
  $region3: #{residual_forward.3} parent=0 // loop_header
    %s11 = sphi 0, %s15
    %p12 = scmp.ge.s32.totalorder %s11, 4
    %s21 = sphi 0, %s23
    %s24 = sphi 0, %s21
    %s25 = sphi 0, %s24
    %s41 = sphi 0, %s25
    %s45 = sphi 0, %s45
    %s47 = sphi 0, %s45
    %s48 = sphi 0, %s47
    %s62 = sphi 0, %s48
    %s68 = sphi 0, %s70
    %s71 = sphi 0, %s68
    %s72 = sphi 0, %s71
    %s88 = sphi 0, %s72
    %s94 = sphi 0, %s96
    %s97 = sphi 0, %s94
    %s98 = sphi 0, %s97
    %s114 = sphi 0, %s98
    %s120 = sphi 0, %s122
    %s123 = sphi 0, %s120
    %s124 = sphi 0, %s123
    %s140 = sphi 0, %s124
  $region4: #{residual_forward.3} parent=0 // loop_header_branch
    %14 = sbr.rel (%p12) target = $region8
  $region5: #{residual_forward.3} parent=0 // loop_body
    %s16 = ssub.s32 %s11, 1
    %s17 = ssub.s32 %s11, 2
    %s18 = sadd.s32 %s11, 1
    %s19 = ssub.s32 %s11, %s18
    %p20 = scmp.eq.s32.totalorder %s19, 0
    %s22 = sadd.s32 %s21, 1
    %s23 = scalar_select %p20, %s21, %s22
    %p26 = pneg %p20
    %p27 = scmp.eq.s32.totalorder %s11, 1
    %p28 = por %p26, %p27
    %p29 = scmp.ne.s32.totalorder %s21, %s24
    %p30 = scmp.eq.s32.totalorder %s11, 0
    %p31 = por %p29, %p30
    %p32 = scmp.ne.s32.totalorder %s21, %s24
    %p33 = scmp.eq.s32.totalorder %s16, 1
    %p34 = por %p32, %p33
    %p35 = scmp.ne.s32.totalorder %s24, %s25
    %p36 = scmp.eq.s32.totalorder %s16, 0
    %p37 = por %p35, %p36
    %p38 = scmp.ne.s32.totalorder %s24, %s25
    %p39 = scmp.eq.s32.totalorder %s17, 1
    %p40 = por %p38, %p39
    %p42 = scmp.ne.s32.totalorder %s25, %s41
    %p43 = scmp.eq.s32.totalorder %s17, 0
    %p44 = por %p42, %p43
    %s46 = sadd.s32 %s45, 1
    %p49 = scmp.eq.s32.totalorder %s11, 1
    %p50 = scmp.ne.s32.totalorder %s45, %s47
    %p51 = scmp.eq.s32.totalorder %s11, 0
    %p52 = por %p50, %p51
    %p53 = scmp.ne.s32.totalorder %s45, %s47
    %p54 = scmp.eq.s32.totalorder %s16, 1
    %p55 = por %p53, %p54
    %p56 = scmp.ne.s32.totalorder %s47, %s48
    %p57 = scmp.eq.s32.totalorder %s16, 0
    %p58 = por %p56, %p57
    %p59 = scmp.ne.s32.totalorder %s47, %s48
    %p60 = scmp.eq.s32.totalorder %s17, 1
    %p61 = por %p59, %p60
    %p63 = scmp.ne.s32.totalorder %s48, %s62
    %p64 = scmp.eq.s32.totalorder %s17, 0
    %p65 = por %p63, %p64
    %s66 = ssub.s32 %s11, %s18
    %p67 = scmp.eq.s32.totalorder %s66, 0
    %s69 = sadd.s32 %s68, 1
    %s70 = scalar_select %p67, %s68, %s69
    %p73 = pneg %p67
    %p74 = scmp.eq.s32.totalorder %s11, 1
    %p75 = por %p73, %p74
    %p76 = scmp.ne.s32.totalorder %s68, %s71
    %p77 = scmp.eq.s32.totalorder %s11, 0
    %p78 = por %p76, %p77
    %p79 = scmp.ne.s32.totalorder %s68, %s71
    %p80 = scmp.eq.s32.totalorder %s16, 1
    %p81 = por %p79, %p80
    %p82 = scmp.ne.s32.totalorder %s71, %s72
    %p83 = scmp.eq.s32.totalorder %s16, 0
    %p84 = por %p82, %p83
    %p85 = scmp.ne.s32.totalorder %s71, %s72
    %p86 = scmp.eq.s32.totalorder %s17, 1
    %p87 = por %p85, %p86
    %p89 = scmp.ne.s32.totalorder %s72, %s88
    %p90 = scmp.eq.s32.totalorder %s17, 0
    %p91 = por %p89, %p90
    %s92 = ssub.s32 %s11, %s18
    %p93 = scmp.eq.s32.totalorder %s92, 0
    %s95 = sadd.s32 %s94, 1
    %s96 = scalar_select %p93, %s94, %s95
    %p99 = pneg %p93
    %p100 = scmp.eq.s32.totalorder %s11, 1
    %p101 = por %p99, %p100
    %p102 = scmp.ne.s32.totalorder %s94, %s97
    %p103 = scmp.eq.s32.totalorder %s11, 0
    %p104 = por %p102, %p103
    %p105 = scmp.ne.s32.totalorder %s94, %s97
    %p106 = scmp.eq.s32.totalorder %s16, 1
    %p107 = por %p105, %p106
    %p108 = scmp.ne.s32.totalorder %s97, %s98
    %p109 = scmp.eq.s32.totalorder %s16, 0
    %p110 = por %p108, %p109
    %p111 = scmp.ne.s32.totalorder %s97, %s98
    %p112 = scmp.eq.s32.totalorder %s17, 1
    %p113 = por %p111, %p112
    %p115 = scmp.ne.s32.totalorder %s98, %s114
    %p116 = scmp.eq.s32.totalorder %s17, 0
    %p117 = por %p115, %p116
    %s118 = ssub.s32 %s11, %s18
    %p119 = scmp.eq.s32.totalorder %s118, 0
    %s121 = sadd.s32 %s120, 1
    %s122 = scalar_select %p119, %s120, %s121
    %p125 = pneg %p119
    %p126 = scmp.eq.s32.totalorder %s11, 1
    %p127 = por %p125, %p126
    %p128 = scmp.ne.s32.totalorder %s120, %s123
    %p129 = scmp.eq.s32.totalorder %s11, 0
    %p130 = por %p128, %p129
    %p131 = scmp.ne.s32.totalorder %s120, %s123
    %p132 = scmp.eq.s32.totalorder %s16, 1
    %p133 = por %p131, %p132
    %p134 = scmp.ne.s32.totalorder %s123, %s124
    %p135 = scmp.eq.s32.totalorder %s16, 0
    %p136 = por %p134, %p135
    %p137 = scmp.ne.s32.totalorder %s123, %s124
    %p138 = scmp.eq.s32.totalorder %s17, 1
    %p139 = por %p137, %p138
    %p141 = scmp.ne.s32.totalorder %s124, %s140
    %p142 = scmp.eq.s32.totalorder %s17, 0
    %p143 = por %p141, %p142
    %p144 = scmp.le.s32.totalorder 1, %s11
    %p145 = scmp.lt.s32.totalorder %s11, 3
    %p146 = pnand %p144, %p145
    %p147 = pneg %p146
    // Predicated region
    $region9: #{residual_forward.3} parent=5 // pred_check
      _
    $region10: #{residual_forward.3} parent=5 // pred_check_branch
      %149 = sbr.rel (%p146) target = $region12
    $region11: #{residual_forward.3} parent=5 // pred_region
      %s150 = ssub.s32 %s11, 1
      // Predicated region
      $region13: #{residual_forward.3} parent=11 // pred_check
        %p151 = pneg %p58
      $region14: #{residual_forward.3} parent=11 // pred_check_branch
        %153 = sbr.rel (%p151) target = $region16
      $region15: #{residual_forward.3} parent=11 // pred_region
        _
      $region16: #{residual_forward.3} parent=11 // pred_fallthru
        _
    $region12: #{residual_forward.3} parent=5 // pred_fallthru
      _
    %p154 = scmp.lt.s32.totalorder %s11, 2
    // Predicated region
    $region17: #{residual_forward.3} parent=5 // pred_check
      %p155 = pneg %p154
    $region18: #{residual_forward.3} parent=5 // pred_check_branch
      %157 = sbr.rel (%p155) target = $region20
    $region19: #{residual_forward.3} parent=5 // pred_region
      // Predicated region
      $region21: #{residual_forward.3} parent=19 // pred_check
        %p158 = pneg %p31
      $region22: #{residual_forward.3} parent=19 // pred_check_branch
        %160 = sbr.rel (%p158) target = $region24
      $region23: #{residual_forward.3} parent=19 // pred_region
        %p161 = scmp.lt.s32.totalorder %s11, 1
        %s162 = scalar_select %p161, %s11, 1
        %s163 = smul.addr %s162, 8
        %s164 = smul.addr %s163, 8
        %s165 = scalar_lea.vmem %s0, %s164
      $region24: #{residual_forward.3} parent=19 // pred_fallthru
        _
    $region20: #{residual_forward.3} parent=5 // pred_fallthru
      _
    %p166 = scmp.le.s32.totalorder 1, %s11
    %p167 = scmp.lt.s32.totalorder %s11, 3
    %p168 = pnand %p166, %p167
    %p169 = pneg %p168
    // Predicated region
    $region25: #{residual_forward.3} parent=5 // pred_check
      _
    $region26: #{residual_forward.3} parent=5 // pred_check_branch
      %171 = sbr.rel (%p168) target = $region28
    $region27: #{residual_forward.3} parent=5 // pred_region
      %s172 = ssub.s32 %s11, 1
      %p173 = scmp.lt.s32.totalorder %s16, 1
      %s174 = scalar_select %p173, %s16, 1
      %s175 = smul.addr %s174, 8
      %s176 = smul.addr %s175, 8
      %s177 = scalar_lea.vmem %s0, %s176
      %p178 = pneg %p37
      %p179 = pneg %p34
      %p180 = pneg %p58
      %p181 = pneg %p55
      %p182 = pneg %p84
      %p183 = pneg %p81
      %p184 = scmp.lt.s32.totalorder %s16, 1
      %s185 = scalar_select %p184, %s16, 1
      %s186 = smul.addr %s185, 8
      %s187 = smul.addr %s186, 8
      %s188 = scalar_lea.vmem %s2, %s187
      %p189 = pneg %p110
      %p190 = pneg %p107
      %p191 = scmp.lt.s32.totalorder %s16, 1
      %s192 = scalar_select %p191, %s16, 1
      %s193 = scalar_lea.vmem %s3, %s192
      %p194 = pneg %p136
      %p195 = pneg %p133
      %p196 = scmp.lt.s32.totalorder %s16, 1
      %s197 = scalar_select %p196, %s16, 1
      %s198 = scalar_lea.vmem %s4, %s197
      %p199 = scmp.lt.s32.totalorder %s16, 1
      %s200 = scalar_select %p199, %s16, 1
      %s201 = smul.addr %s200, 8
      %s202 = smul.addr %s201, 8
      %s203 = scalar_lea.vmem %s0, %s202
      %p204 = scmp.lt.s32.totalorder %s16, 1
      %s205 = scalar_select %p204, %s16, 1
      %s206 = smul.addr %s205, 8
      %s207 = smul.addr %s206, 8
      %s208 = scalar_lea.vmem %s2, %s207
      %p209 = scmp.lt.s32.totalorder %s16, 1
      %s210 = scalar_select %p209, %s16, 1
      %s211 = scalar_lea.vmem %s3, %s210
      %p212 = scmp.lt.s32.totalorder %s16, 1
      %s213 = scalar_select %p212, %s16, 1
      %s214 = scalar_lea.vmem %s4, %s213
      %v215 = vld [vmem:[%s203] sm:$0xff]
      %v216 = vld [vmem:[%s203 + $0x8] sm:$0xff]
      %v217 = vld [vmem:[%s203 + $0x10] sm:$0xff]
      %v218 = vld [vmem:[%s203 + $0x18] sm:$0xff]
      %v219 = vld [vmem:[%s203 + $0x20] sm:$0xff]
      %v220 = vld [vmem:[%s203 + $0x28] sm:$0xff]
      %v221 = vld [vmem:[%s203 + $0x30] sm:$0xff]
      %v222 = vld [vmem:[%s203 + $0x38] sm:$0xff]
      %v223 = vld [vmem:[%s1] sm:$0xff]
      %v224 = vld [vmem:[%s1 + $0x8] sm:$0xff]
      %v225 = vld [vmem:[%s1 + $0x10] sm:$0xff]
      %v226 = vld [vmem:[%s1 + $0x18] sm:$0xff]
      %v227 = vld [vmem:[%s1 + $0x20] sm:$0xf]
      %vm228 = vcmask 293888
      %v230 = vsel %vm228, %v215, 0
      %v233 = vsel %vm228, %v216, 0
      %v236 = vsel %vm228, %v217, 0
      %v239 = vsel %vm228, %v218, 0
      %v242 = vsel %vm228, %v219, 0
      %v245 = vsel %vm228, %v220, 0
      %v248 = vsel %vm228, %v221, 0
      %v251 = vsel %vm228, %v222, 0
      %vm253 = vcmask 1043456
      %v255 = vsel %vm253, %v227, 0
      %257 = vmatpush.msra.mxu0 0.0
      %258 = vmatpush.msra.mxu0 0.0
      %259 = vmatpush.msra.mxu0 0.0
      %260 = vmatpush.msra.mxu0 0.0
      %261 = vmatpush.msra.mxu0 0.0
      %262 = vmatpush.msra.mxu0 0.0
      %263 = vmatpush.msra.mxu0 0.0
      %264 = vmatpush.msra.mxu0 0.0
      %265 = vmatpush.msra.mxu0 0.0
      %266 = vmatpush.msra.mxu0 0.0
      %267 = vmatpush.msra.mxu0 0.0
      %268 = vmatpush.msra.mxu0 %v255
      %269 = vmatpush.msra.mxu0 %v226
      %270 = vmatpush.msra.mxu0 %v225
      %271 = vmatpush.msra.mxu0 %v224
      %272 = vmatpush.msra.mxu0 %v223
      %273 = vmatmul.f32.gmra.mxu0 %v230
      %v274 = vpop.f32.mrf.mxu0
      %v275 = vadd.f32 0.0, %v274
      %276 = vmatmul.f32.gmra.mxu0 %v233
      %v277 = vpop.f32.mrf.mxu0
      %v278 = vadd.f32 0.0, %v277
      %279 = vmatmul.f32.gmra.mxu0 %v236
      %v280 = vpop.f32.mrf.mxu0
      %v281 = vadd.f32 0.0, %v280
      %282 = vmatmul.f32.gmra.mxu0 %v239
      %v283 = vpop.f32.mrf.mxu0
      %v284 = vadd.f32 0.0, %v283
      %285 = vmatmul.f32.gmra.mxu0 %v242
      %v286 = vpop.f32.mrf.mxu0
      %v287 = vadd.f32 0.0, %v286
      %288 = vmatmul.f32.gmra.mxu0 %v245
      %v289 = vpop.f32.mrf.mxu0
      %v290 = vadd.f32 0.0, %v289
      %291 = vmatmul.f32.gmra.mxu0 %v248
      %v292 = vpop.f32.mrf.mxu0
      %v293 = vadd.f32 0.0, %v292
      %294 = vmatmul.f32.gmra.mxu0 %v251
      %v295 = vpop.f32.mrf.mxu0
      %v296 = vadd.f32 0.0, %v295
      %297 = vdwg.mxu0
      %298 = vst [vmem:[%s208] sm:$0xff] %v275
      %299 = vst [vmem:[%s208 + $0x8] sm:$0xff] %v278
      %300 = vst [vmem:[%s208 + $0x10] sm:$0xff] %v281
      %301 = vst [vmem:[%s208 + $0x18] sm:$0xff] %v284
      %302 = vst [vmem:[%s208 + $0x20] sm:$0xff] %v287
      %303 = vst [vmem:[%s208 + $0x28] sm:$0xff] %v290
      %304 = vst [vmem:[%s208 + $0x30] sm:$0xff] %v293
      %305 = vst [vmem:[%s208 + $0x38] sm:$0xff] %v296
      %v306 = vadd.f32 %v275, %v278
      %v307 = vadd.f32 %v306, %v281
      %v308 = vadd.f32 %v307, %v284
      %v309 = vadd.f32 %v308, %v287
      %v310 = vadd.f32 %v309, %v290
      %v311 = vadd.f32 %v310, %v293
      %v312 = vadd.f32 %v311, %v296
      %v313 = vrot.slane %v312, 4
      %v314 = vadd.f32 %v312, %v313
      %v315 = vrot.slane %v314, 2
      %v316 = vadd.f32 %v314, %v315
      %v317 = vrot.slane %v316, 1
      %v318 = vadd.f32 %v316, %v317
      %319 = vst [vmem:[%s211] sm:$0x1] %v318
      %v320 = vmul.f32 %v275, %v275
      %v321 = vmul.f32 %v278, %v278
      %v322 = vmul.f32 %v281, %v281
      %v323 = vmul.f32 %v284, %v284
      %v324 = vmul.f32 %v287, %v287
      %v325 = vmul.f32 %v290, %v290
      %v326 = vmul.f32 %v293, %v293
      %v327 = vmul.f32 %v296, %v296
      %v328 = vadd.f32 %v320, %v321
      %v329 = vadd.f32 %v328, %v322
      %v330 = vadd.f32 %v329, %v323
      %v331 = vadd.f32 %v330, %v324
      %v332 = vadd.f32 %v331, %v325
      %v333 = vadd.f32 %v332, %v326
      %v334 = vadd.f32 %v333, %v327
      %v335 = vrot.slane %v334, 4
      %v336 = vadd.f32 %v334, %v335
      %v337 = vrot.slane %v336, 2
      %v338 = vadd.f32 %v336, %v337
      %v339 = vrot.slane %v338, 1
      %v340 = vadd.f32 %v338, %v339
      %341 = vst [vmem:[%s214] sm:$0x1] %v340
      %p342 = scmp.lt.s32.totalorder %s16, 1
      %s343 = scalar_select %p342, %s16, 1
      %s344 = smul.addr %s343, 8
      %s345 = smul.addr %s344, 8
      %s346 = scalar_lea.vmem %s2, %s345
      %p347 = scmp.lt.s32.totalorder %s16, 1
      %s348 = scalar_select %p347, %s16, 1
      %s349 = scalar_lea.vmem %s3, %s348
      %p350 = scmp.lt.s32.totalorder %s16, 1
      %s351 = scalar_select %p350, %s16, 1
      %s352 = scalar_lea.vmem %s4, %s351
      // Predicated region
      $region29: #{residual_forward.3} parent=27 // pred_check
        %p353 = pneg %p81
      $region30: #{residual_forward.3} parent=27 // pred_check_branch
        %355 = sbr.rel (%p353) target = $region32
      $region31: #{residual_forward.3} parent=27 // pred_region
        _
      $region32: #{residual_forward.3} parent=27 // pred_fallthru
        _
      // Predicated region
      $region33: #{residual_forward.3} parent=27 // pred_check
        %p356 = pneg %p107
      $region34: #{residual_forward.3} parent=27 // pred_check_branch
        %358 = sbr.rel (%p356) target = $region36
      $region35: #{residual_forward.3} parent=27 // pred_region
        _
      $region36: #{residual_forward.3} parent=27 // pred_fallthru
        _
      // Predicated region
      $region37: #{residual_forward.3} parent=27 // pred_check
        %p359 = pneg %p133
      $region38: #{residual_forward.3} parent=27 // pred_check_branch
        %361 = sbr.rel (%p359) target = $region40
      $region39: #{residual_forward.3} parent=27 // pred_region
        _
      $region40: #{residual_forward.3} parent=27 // pred_fallthru
        _
    $region28: #{residual_forward.3} parent=5 // pred_fallthru
      _
    %p362 = scmp.le.s32.totalorder 2, %s11
    // Predicated region
    $region41: #{residual_forward.3} parent=5 // pred_check
      %p363 = pneg %p362
    $region42: #{residual_forward.3} parent=5 // pred_check_branch
      %365 = sbr.rel (%p363) target = $region44
    $region43: #{residual_forward.3} parent=5 // pred_region
      %s366 = ssub.s32 %s11, 2
      // Predicated region
      $region45: #{residual_forward.3} parent=43 // pred_check
        %p367 = pneg %p87
      $region46: #{residual_forward.3} parent=43 // pred_check_branch
        %369 = sbr.rel (%p367) target = $region48
      $region47: #{residual_forward.3} parent=43 // pred_region
        %p370 = scmp.lt.s32.totalorder %s17, 1
        %s371 = scalar_select %p370, %s17, 1
        %s372 = smul.addr %s371, 8
        %s373 = smul.addr %s372, 8
        %s374 = scalar_lea.vmem %s2, %s373
      $region48: #{residual_forward.3} parent=43 // pred_fallthru
        _
      // Predicated region
      $region49: #{residual_forward.3} parent=43 // pred_check
        %p375 = pneg %p113
      $region50: #{residual_forward.3} parent=43 // pred_check_branch
        %377 = sbr.rel (%p375) target = $region52
      $region51: #{residual_forward.3} parent=43 // pred_region
        %p378 = scmp.lt.s32.totalorder %s17, 1
        %s379 = scalar_select %p378, %s17, 1
        %s380 = scalar_lea.vmem %s3, %s379
      $region52: #{residual_forward.3} parent=43 // pred_fallthru
        _
      // Predicated region
      $region53: #{residual_forward.3} parent=43 // pred_check
        %p381 = pneg %p139
      $region54: #{residual_forward.3} parent=43 // pred_check_branch
        %383 = sbr.rel (%p381) target = $region56
      $region55: #{residual_forward.3} parent=43 // pred_region
        %p384 = scmp.lt.s32.totalorder %s17, 1
        %s385 = scalar_select %p384, %s17, 1
        %s386 = scalar_lea.vmem %s4, %s385
      $region56: #{residual_forward.3} parent=43 // pred_fallthru
        _
    $region44: #{residual_forward.3} parent=5 // pred_fallthru
      _
  $region6: #{residual_forward.3} parent=0 // loop_footer
    %s15 = sadd.s32 1, %s11
  $region7: #{residual_forward.3} parent=0 // loop_footer_branch
    %10 = sbr.rel target = $region3
  $region8: #{residual_forward.3} parent=0 // loop_exit
    _

// kernel: residual_forward.4
$region0: #{residual_forward.4}
  #allocation0 [shape = 'u32[]', space=smem, size = 0x4, offset = 0x4, fixed_abs, tag = 'smem constant byte address 0x4 - core index']
  #allocation1 [shape = 'u32[72,128]{1,0:T(1,128)}', space=vmem, size = 0x9000, scoped, tag = 'internal scratch']
  #allocation2 [shape = 'f32[88,128]{1,0:T(8,128)}', space=vmem, size = 0xb000, scoped, tag = 'scratch operand']
  %s0 = inlined_call_operand.vmem [shape: f32[2,64,128], index: 0, kind: input, shape index: {}]
  %s1 = inlined_call_operand.vmem [shape: f32[1,128], index: 1, kind: input, shape index: {}]
  %s2 = inlined_call_operand.vmem [shape: f32[1,128], index: 2, kind: input, shape index: {}]
  %s3 = inlined_call_operand.vmem [shape: f32[9,128,128], index: 3, kind: input, shape index: {}]
  %s4 = inlined_call_operand.vmem [shape: f32[2,64,128], index: 4, kind: output, shape index: {0}]
  %s5 = inlined_call_operand.vmem [shape: f32[2,1,128], index: 5, kind: output, shape index: {1}]
  %s6 = inlined_call_operand.vmem [shape: f32[2,1,128], index: 6, kind: output, shape index: {2}]
  %7 = xla_tuple %s4, %s5, %s6
  %s8 = sld [smem:[#allocation0]]
  $region65: #{residual_forward.4} parent=0
    _
  %s10 = ssub.s32 1, %s8
  %s11 = scalar_select 0, %s10, %s8
  loop: start=0, step=1, limit=4
  $region2: #{residual_forward.4} parent=0 // loop_pre_header
    _
  $region3: #{residual_forward.4} parent=0 // loop_header
    %s13 = sphi 0, %s17
    %p14 = scmp.ge.s32.totalorder %s13, 4
    %s23 = sphi 0, %s25
    %s26 = sphi 0, %s23
    %s27 = sphi 0, %s26
    %s43 = sphi 0, %s27
    %s47 = sphi 0, %s47
    %s49 = sphi 0, %s47
    %s50 = sphi 0, %s49
    %s64 = sphi 0, %s50
    %s68 = sphi 0, %s68
    %s70 = sphi 0, %s68
    %s71 = sphi 0, %s70
    %s85 = sphi 0, %s71
    %s89 = sphi 0, %s89
    %s91 = sphi 0, %s89
    %s92 = sphi 0, %s91
    %s106 = sphi 0, %s92
    %s112 = sphi 0, %s114
    %s115 = sphi 0, %s112
    %s116 = sphi 0, %s115
    %s132 = sphi 0, %s116
    %s138 = sphi 0, %s140
    %s141 = sphi 0, %s138
    %s142 = sphi 0, %s141
    %s158 = sphi 0, %s142
    %s164 = sphi 0, %s166
    %s167 = sphi 0, %s164
    %s168 = sphi 0, %s167
    %s184 = sphi 0, %s168
  $region4: #{residual_forward.4} parent=0 // loop_header_branch
    %16 = sbr.rel (%p14) target = $region8
  $region5: #{residual_forward.4} parent=0 // loop_body
    %s18 = ssub.s32 %s13, 1
    %s19 = ssub.s32 %s13, 2
    %s20 = sadd.s32 %s13, 1
    %s21 = ssub.s32 %s13, %s20
    %p22 = scmp.eq.s32.totalorder %s21, 0
    %s24 = sadd.s32 %s23, 1
    %s25 = scalar_select %p22, %s23, %s24
    %p28 = pneg %p22
    %p29 = scmp.eq.s32.totalorder %s13, 1
    %p30 = por %p28, %p29
    %p31 = scmp.ne.s32.totalorder %s23, %s26
    %p32 = scmp.eq.s32.totalorder %s13, 0
    %p33 = por %p31, %p32
    %p34 = scmp.ne.s32.totalorder %s23, %s26
    %p35 = scmp.eq.s32.totalorder %s18, 1
    %p36 = por %p34, %p35
    %p37 = scmp.ne.s32.totalorder %s26, %s27
    %p38 = scmp.eq.s32.totalorder %s18, 0
    %p39 = por %p37, %p38
    %p40 = scmp.ne.s32.totalorder %s26, %s27
    %p41 = scmp.eq.s32.totalorder %s19, 1
    %p42 = por %p40, %p41
    %p44 = scmp.ne.s32.totalorder %s27, %s43
    %p45 = scmp.eq.s32.totalorder %s19, 0
    %p46 = por %p44, %p45
    %s48 = sadd.s32 %s47, 1
    %p51 = scmp.eq.s32.totalorder %s13, 1
    %p52 = scmp.ne.s32.totalorder %s47, %s49
    %p53 = scmp.eq.s32.totalorder %s13, 0
    %p54 = por %p52, %p53
    %p55 = scmp.ne.s32.totalorder %s47, %s49
    %p56 = scmp.eq.s32.totalorder %s18, 1
    %p57 = por %p55, %p56
    %p58 = scmp.ne.s32.totalorder %s49, %s50
    %p59 = scmp.eq.s32.totalorder %s18, 0
    %p60 = por %p58, %p59
    %p61 = scmp.ne.s32.totalorder %s49, %s50
    %p62 = scmp.eq.s32.totalorder %s19, 1
    %p63 = por %p61, %p62
    %p65 = scmp.ne.s32.totalorder %s50, %s64
    %p66 = scmp.eq.s32.totalorder %s19, 0
    %p67 = por %p65, %p66
    %s69 = sadd.s32 %s68, 1
    %p72 = scmp.eq.s32.totalorder %s13, 1
    %p73 = scmp.ne.s32.totalorder %s68, %s70
    %p74 = scmp.eq.s32.totalorder %s13, 0
    %p75 = por %p73, %p74
    %p76 = scmp.ne.s32.totalorder %s68, %s70
    %p77 = scmp.eq.s32.totalorder %s18, 1
    %p78 = por %p76, %p77
    %p79 = scmp.ne.s32.totalorder %s70, %s71
    %p80 = scmp.eq.s32.totalorder %s18, 0
    %p81 = por %p79, %p80
    %p82 = scmp.ne.s32.totalorder %s70, %s71
    %p83 = scmp.eq.s32.totalorder %s19, 1
    %p84 = por %p82, %p83
    %p86 = scmp.ne.s32.totalorder %s71, %s85
    %p87 = scmp.eq.s32.totalorder %s19, 0
    %p88 = por %p86, %p87
    %s90 = sadd.s32 %s89, 1
    %p93 = scmp.eq.s32.totalorder %s13, 1
    %p94 = scmp.ne.s32.totalorder %s89, %s91
    %p95 = scmp.eq.s32.totalorder %s13, 0
    %p96 = por %p94, %p95
    %p97 = scmp.ne.s32.totalorder %s89, %s91
    %p98 = scmp.eq.s32.totalorder %s18, 1
    %p99 = por %p97, %p98
    %p100 = scmp.ne.s32.totalorder %s91, %s92
    %p101 = scmp.eq.s32.totalorder %s18, 0
    %p102 = por %p100, %p101
    %p103 = scmp.ne.s32.totalorder %s91, %s92
    %p104 = scmp.eq.s32.totalorder %s19, 1
    %p105 = por %p103, %p104
    %p107 = scmp.ne.s32.totalorder %s92, %s106
    %p108 = scmp.eq.s32.totalorder %s19, 0
    %p109 = por %p107, %p108
    %s110 = ssub.s32 %s13, %s20
    %p111 = scmp.eq.s32.totalorder %s110, 0
    %s113 = sadd.s32 %s112, 1
    %s114 = scalar_select %p111, %s112, %s113
    %p117 = pneg %p111
    %p118 = scmp.eq.s32.totalorder %s13, 1
    %p119 = por %p117, %p118
    %p120 = scmp.ne.s32.totalorder %s112, %s115
    %p121 = scmp.eq.s32.totalorder %s13, 0
    %p122 = por %p120, %p121
    %p123 = scmp.ne.s32.totalorder %s112, %s115
    %p124 = scmp.eq.s32.totalorder %s18, 1
    %p125 = por %p123, %p124
    %p126 = scmp.ne.s32.totalorder %s115, %s116
    %p127 = scmp.eq.s32.totalorder %s18, 0
    %p128 = por %p126, %p127
    %p129 = scmp.ne.s32.totalorder %s115, %s116
    %p130 = scmp.eq.s32.totalorder %s19, 1
    %p131 = por %p129, %p130
    %p133 = scmp.ne.s32.totalorder %s116, %s132
    %p134 = scmp.eq.s32.totalorder %s19, 0
    %p135 = por %p133, %p134
    %s136 = ssub.s32 %s13, %s20
    %p137 = scmp.eq.s32.totalorder %s136, 0
    %s139 = sadd.s32 %s138, 1
    %s140 = scalar_select %p137, %s138, %s139
    %p143 = pneg %p137
    %p144 = scmp.eq.s32.totalorder %s13, 1
    %p145 = por %p143, %p144
    %p146 = scmp.ne.s32.totalorder %s138, %s141
    %p147 = scmp.eq.s32.totalorder %s13, 0
    %p148 = por %p146, %p147
    %p149 = scmp.ne.s32.totalorder %s138, %s141
    %p150 = scmp.eq.s32.totalorder %s18, 1
    %p151 = por %p149, %p150
    %p152 = scmp.ne.s32.totalorder %s141, %s142
    %p153 = scmp.eq.s32.totalorder %s18, 0
    %p154 = por %p152, %p153
    %p155 = scmp.ne.s32.totalorder %s141, %s142
    %p156 = scmp.eq.s32.totalorder %s19, 1
    %p157 = por %p155, %p156
    %p159 = scmp.ne.s32.totalorder %s142, %s158
    %p160 = scmp.eq.s32.totalorder %s19, 0
    %p161 = por %p159, %p160
    %s162 = ssub.s32 %s13, %s20
    %p163 = scmp.eq.s32.totalorder %s162, 0
    %s165 = sadd.s32 %s164, 1
    %s166 = scalar_select %p163, %s164, %s165
    %p169 = pneg %p163
    %p170 = scmp.eq.s32.totalorder %s13, 1
    %p171 = por %p169, %p170
    %p172 = scmp.ne.s32.totalorder %s164, %s167
    %p173 = scmp.eq.s32.totalorder %s13, 0
    %p174 = por %p172, %p173
    %p175 = scmp.ne.s32.totalorder %s164, %s167
    %p176 = scmp.eq.s32.totalorder %s18, 1
    %p177 = por %p175, %p176
    %p178 = scmp.ne.s32.totalorder %s167, %s168
    %p179 = scmp.eq.s32.totalorder %s18, 0
    %p180 = por %p178, %p179
    %p181 = scmp.ne.s32.totalorder %s167, %s168
    %p182 = scmp.eq.s32.totalorder %s19, 1
    %p183 = por %p181, %p182
    %p185 = scmp.ne.s32.totalorder %s168, %s184
    %p186 = scmp.eq.s32.totalorder %s19, 0
    %p187 = por %p185, %p186
    %p188 = scmp.le.s32.totalorder 1, %s13
    %p189 = scmp.lt.s32.totalorder %s13, 3
    %p190 = pnand %p188, %p189
    %p191 = pneg %p190
    // Predicated region
    $region9: #{residual_forward.4} parent=5 // pred_check
      _
    $region10: #{residual_forward.4} parent=5 // pred_check_branch
      %193 = sbr.rel (%p190) target = $region12
    $region11: #{residual_forward.4} parent=5 // pred_region
      %s194 = ssub.s32 %s13, 1
      // Predicated region
      $region13: #{residual_forward.4} parent=11 // pred_check
        %p195 = pneg %p60
      $region14: #{residual_forward.4} parent=11 // pred_check_branch
        %197 = sbr.rel (%p195) target = $region16
      $region15: #{residual_forward.4} parent=11 // pred_region
        _
      $region16: #{residual_forward.4} parent=11 // pred_fallthru
        _
      // Predicated region
      $region17: #{residual_forward.4} parent=11 // pred_check
        %p198 = pneg %p81
      $region18: #{residual_forward.4} parent=11 // pred_check_branch
        %200 = sbr.rel (%p198) target = $region20
      $region19: #{residual_forward.4} parent=11 // pred_region
        _
      $region20: #{residual_forward.4} parent=11 // pred_fallthru
        _
      // Predicated region
      $region21: #{residual_forward.4} parent=11 // pred_check
        %p201 = pneg %p102
      $region22: #{residual_forward.4} parent=11 // pred_check_branch
        %203 = sbr.rel (%p201) target = $region24
      $region23: #{residual_forward.4} parent=11 // pred_region
        _
      $region24: #{residual_forward.4} parent=11 // pred_fallthru
        _
    $region12: #{residual_forward.4} parent=5 // pred_fallthru
      _
    %p204 = scmp.lt.s32.totalorder %s13, 2
    // Predicated region
    $region25: #{residual_forward.4} parent=5 // pred_check
      %p205 = pneg %p204
    $region26: #{residual_forward.4} parent=5 // pred_check_branch
      %207 = sbr.rel (%p205) target = $region28
    $region27: #{residual_forward.4} parent=5 // pred_region
      // Predicated region
      $region29: #{residual_forward.4} parent=27 // pred_check
        %p208 = pneg %p33
      $region30: #{residual_forward.4} parent=27 // pred_check_branch
        %210 = sbr.rel (%p208) target = $region32
      $region31: #{residual_forward.4} parent=27 // pred_region
        %p211 = scmp.lt.s32.totalorder %s13, 1
        %s212 = scalar_select %p211, %s13, 1
        %s213 = smul.addr %s212, 8
        %s214 = smul.addr %s213, 8
        %s215 = scalar_lea.vmem %s0, %s214
      $region32: #{residual_forward.4} parent=27 // pred_fallthru
        _
    $region28: #{residual_forward.4} parent=5 // pred_fallthru
      _
    %p216 = scmp.le.s32.totalorder 1, %s13
    %p217 = scmp.lt.s32.totalorder %s13, 3
    %p218 = pnand %p216, %p217
    %p219 = pneg %p218
    // Predicated region
    $region33: #{residual_forward.4} parent=5 // pred_check
      _
    $region34: #{residual_forward.4} parent=5 // pred_check_branch
      %221 = sbr.rel (%p218) target = $region36
    $region35: #{residual_forward.4} parent=5 // pred_region
      %s222 = ssub.s32 %s13, 1
      %p223 = scmp.lt.s32.totalorder %s18, 1
      %s224 = scalar_select %p223, %s18, 1
      %s225 = smul.addr %s224, 8
      %s226 = smul.addr %s225, 8
      %s227 = scalar_lea.vmem %s0, %s226
      %p228 = pneg %p39
      %p229 = pneg %p36
      %p230 = pneg %p60
      %p231 = pneg %p57
      %p232 = pneg %p81
      %p233 = pneg %p78
      %p234 = pneg %p102
      %p235 = pneg %p99
      %p236 = pneg %p128
      %p237 = pneg %p125
      %p238 = scmp.lt.s32.totalorder %s18, 1
      %s239 = scalar_select %p238, %s18, 1
      %s240 = smul.addr %s239, 8
      %s241 = smul.addr %s240, 8
      %s242 = scalar_lea.vmem %s4, %s241
      %p243 = pneg %p154
      %p244 = pneg %p151
      %p245 = scmp.lt.s32.totalorder %s18, 1
      %s246 = scalar_select %p245, %s18, 1
      %s247 = scalar_lea.vmem %s5, %s246
      %p248 = pneg %p180
      %p249 = pneg %p177
      %p250 = scmp.lt.s32.totalorder %s18, 1
      %s251 = scalar_select %p250, %s18, 1
      %s252 = scalar_lea.vmem %s6, %s251
      %p253 = scmp.lt.s32.totalorder %s18, 1
      %s254 = scalar_select %p253, %s18, 1
      %s255 = smul.addr %s254, 8
      %s256 = smul.addr %s255, 8
      %s257 = scalar_lea.vmem %s0, %s256
      %p258 = scmp.lt.s32.totalorder %s18, 1
      %s259 = scalar_select %p258, %s18, 1
      %s260 = smul.addr %s259, 8
      %s261 = smul.addr %s260, 8
      %s262 = scalar_lea.vmem %s4, %s261
      %p263 = scmp.lt.s32.totalorder %s18, 1
      %s264 = scalar_select %p263, %s18, 1
      %s265 = scalar_lea.vmem %s5, %s264
      %p266 = scmp.lt.s32.totalorder %s18, 1
      %s267 = scalar_select %p266, %s18, 1
      %s268 = scalar_lea.vmem %s6, %s267
      %v269 = vld [vmem:[%s257] sm:$0xff]
      %v270 = vld [vmem:[%s257 + $0x8] sm:$0xff]
      %v271 = vld [vmem:[%s257 + $0x10] sm:$0xff]
      %v272 = vld [vmem:[%s257 + $0x18] sm:$0xff]
      %v273 = vld [vmem:[%s257 + $0x20] sm:$0xff]
      %v274 = vld [vmem:[%s257 + $0x28] sm:$0xff]
      %v275 = vld [vmem:[%s257 + $0x30] sm:$0xff]
      %v276 = vld [vmem:[%s257 + $0x38] sm:$0xff]
      %v277 = vld [vmem:[%s1] sm:$0x1]
      %v279 = vperm.slane %v277, 0
      %v281 = vmul.f32 %v269, %v279
      %v282 = vmul.f32 %v270, %v279
      %v283 = vmul.f32 %v271, %v279
      %v284 = vmul.f32 %v272, %v279
      %v285 = vmul.f32 %v273, %v279
      %v286 = vmul.f32 %v274, %v279
      %v287 = vmul.f32 %v275, %v279
      %v288 = vmul.f32 %v276, %v279
      %v289 = vld [vmem:[%s2] sm:$0x1]
      %v291 = vperm.slane %v289, 0
      %v293 = vadd.f32 %v281, %v291
      %v294 = vadd.f32 %v282, %v291
      %v295 = vadd.f32 %v283, %v291
      %v296 = vadd.f32 %v284, %v291
      %v297 = vadd.f32 %v285, %v291
      %v298 = vadd.f32 %v286, %v291
      %v299 = vadd.f32 %v287, %v291
      %v300 = vadd.f32 %v288, %v291
      %v301 = vmax.f32 %v293, 0.0
      %v302 = vmax.f32 %v294, 0.0
      %v303 = vmax.f32 %v295, 0.0
      %v304 = vmax.f32 %v296, 0.0
      %v305 = vmax.f32 %v297, 0.0
      %v306 = vmax.f32 %v298, 0.0
      %v307 = vmax.f32 %v299, 0.0
      %v308 = vmax.f32 %v300, 0.0
      %309 = vst [vmem:[#allocation2] sm:$0xff] 0.0
      %310 = vst [vmem:[#allocation2 + $0x8] sm:$0x1] 0.0
      %311 = vst [vmem:[#allocation2 + $0x49] sm:$0xff] 0.0
      %312 = vst [vmem:[#allocation2 + $0x51] sm:$0x7f] 0.0
      %313 = vst [vmem:[#allocation2 + $0x9] sm:$0xff] %v301
      %314 = vst [vmem:[#allocation2 + $0x11] sm:$0xff] %v302
      %315 = vst [vmem:[#allocation2 + $0x19] sm:$0xff] %v303
      %316 = vst [vmem:[#allocation2 + $0x21] sm:$0xff] %v304
      %317 = vst [vmem:[#allocation2 + $0x29] sm:$0xff] %v305
      %318 = vst [vmem:[#allocation2 + $0x31] sm:$0xff] %v306
      %319 = vst [vmem:[#allocation2 + $0x39] sm:$0xff] %v307
      %320 = vst [vmem:[#allocation2 + $0x41] sm:$0xff] %v308
      %v321 = vlaneseq
      %v322 = vshrl.u32 %v321, 7
      %v323 = vadd.s32 %v322, 8
      %v324 = vadd.s32 %v322, 16
      %v325 = vadd.s32 %v322, 24
      %v326 = vadd.s32 %v322, 32
      %v327 = vadd.s32 %v322, 40
      %v328 = vadd.s32 %v322, 48
      %v329 = vadd.s32 %v322, 56
      %vm330 = vcmp.lt.s32.totalorder %v322, 0
      %v331 = vsub.s32 0, %v322
      %v332 = vsel %vm330, %v331, %v322
      %v333 = vshrl.u32 %v332, 3
      %v334 = vand.u32 %v332, 7
      %v335 = vsub.s32 0, %v334
      %v336 = vsel %vm330, %v335, %v334
      %vm337 = vcmp.lt.s32.totalorder %v323, 0
      %v338 = vsub.s32 0, %v323
      %v339 = vsel %vm337, %v338, %v323
      %v340 = vshrl.u32 %v339, 3
      %v341 = vand.u32 %v339, 7
      %v342 = vsub.s32 0, %v341
      %v343 = vsel %vm337, %v342, %v341
      %vm344 = vcmp.lt.s32.totalorder %v324, 0
      %v345 = vsub.s32 0, %v324
      %v346 = vsel %vm344, %v345, %v324
      %v347 = vshrl.u32 %v346, 3
      %v348 = vand.u32 %v346, 7
      %v349 = vsub.s32 0, %v348
      %v350 = vsel %vm344, %v349, %v348
      %vm351 = vcmp.lt.s32.totalorder %v325, 0
      %v352 = vsub.s32 0, %v325
      %v353 = vsel %vm351, %v352, %v325
      %v354 = vshrl.u32 %v353, 3
      %v355 = vand.u32 %v353, 7
      %v356 = vsub.s32 0, %v355
      %v357 = vsel %vm351, %v356, %v355
      %vm358 = vcmp.lt.s32.totalorder %v326, 0
      %v359 = vsub.s32 0, %v326
      %v360 = vsel %vm358, %v359, %v326
      %v361 = vshrl.u32 %v360, 3
      %v362 = vand.u32 %v360, 7
      %v363 = vsub.s32 0, %v362
      %v364 = vsel %vm358, %v363, %v362
      %vm365 = vcmp.lt.s32.totalorder %v327, 0
      %v366 = vsub.s32 0, %v327
      %v367 = vsel %vm365, %v366, %v327
      %v368 = vshrl.u32 %v367, 3
      %v369 = vand.u32 %v367, 7
      %v370 = vsub.s32 0, %v369
      %v371 = vsel %vm365, %v370, %v369
      %vm372 = vcmp.lt.s32.totalorder %v328, 0
      %v373 = vsub.s32 0, %v328
      %v374 = vsel %vm372, %v373, %v328
      %v375 = vshrl.u32 %v374, 3
      %v376 = vand.u32 %v374, 7
      %v377 = vsub.s32 0, %v376
      %v378 = vsel %vm372, %v377, %v376
      %vm379 = vcmp.lt.s32.totalorder %v329, 0
      %v380 = vsub.s32 0, %v329
      %v381 = vsel %vm379, %v380, %v329
      %v382 = vshrl.u32 %v381, 3
      %v383 = vand.u32 %v381, 7
      %v384 = vsub.s32 0, %v383
      %v385 = vsel %vm379, %v384, %v383
      %vm386 = vcmp.ne.s32.totalorder %v336, 0
      %vm387 = vcmp.ne.s32.totalorder %v343, 0
      %vm388 = vcmp.ne.s32.totalorder %v350, 0
      %vm389 = vcmp.ne.s32.totalorder %v357, 0
      %vm390 = vcmp.ne.s32.totalorder %v364, 0
      %vm391 = vcmp.ne.s32.totalorder %v371, 0
      %vm392 = vcmp.ne.s32.totalorder %v378, 0
      %vm393 = vcmp.ne.s32.totalorder %v385, 0
      %vm394 = vcmp.lt.s32.totalorder %v336, 0
      %vm395 = vcmp.lt.s32.totalorder %v343, 0
      %vm396 = vcmp.lt.s32.totalorder %v350, 0
      %vm397 = vcmp.lt.s32.totalorder %v357, 0
      %vm398 = vcmp.lt.s32.totalorder %v364, 0
      %vm399 = vcmp.lt.s32.totalorder %v371, 0
      %vm400 = vcmp.lt.s32.totalorder %v378, 0
      %vm401 = vcmp.lt.s32.totalorder %v385, 0
      %vm402 = vmand %vm394, %vm386
      %vm403 = vmand %vm395, %vm387
      %vm404 = vmand %vm396, %vm388
      %vm405 = vmand %vm397, %vm389
      %vm406 = vmand %vm398, %vm390
      %vm407 = vmand %vm399, %vm391
      %vm408 = vmand %vm400, %vm392
      %vm409 = vmand %vm401, %vm393
      %v410 = vadd.s32 %v336, 8
      %v411 = vadd.s32 %v343, 8
      %v412 = vadd.s32 %v350, 8
      %v413 = vadd.s32 %v357, 8
      %v414 = vadd.s32 %v364, 8
      %v415 = vadd.s32 %v371, 8
      %v416 = vadd.s32 %v378, 8
      %v417 = vadd.s32 %v385, 8
      %v418 = vsel %vm402, %v410, %v336
      %v419 = vsel %vm403, %v411, %v343
      %v420 = vsel %vm404, %v412, %v350
      %v421 = vsel %vm405, %v413, %v357
      %v422 = vsel %vm406, %v414, %v364
      %v423 = vsel %vm407, %v415, %v371
      %v424 = vsel %vm408, %v416, %v378
      %v425 = vsel %vm409, %v417, %v385
      %v426 = vld [vmem:[#allocation2] sm:$0xff]
      %v427 = vld [vmem:[#allocation2 + $0x8] sm:$0xff]
      %v428 = vld [vmem:[#allocation2 + $0x10] sm:$0xff]
      %v429 = vld [vmem:[#allocation2 + $0x18] sm:$0xff]
      %v430 = vld [vmem:[#allocation2 + $0x20] sm:$0xff]
      %v431 = vld [vmem:[#allocation2 + $0x28] sm:$0xff]
      %v432 = vld [vmem:[#allocation2 + $0x30] sm:$0xff]
      %v433 = vld [vmem:[#allocation2 + $0x38] sm:$0xff]
      %vm434 = vcmp.gt.s32.totalorder %v418, 0
      %vm435 = vcmp.gt.s32.totalorder %v419, 0
      %vm436 = vcmp.gt.s32.totalorder %v420, 0
      %vm437 = vcmp.gt.s32.totalorder %v421, 0
      %vm438 = vcmp.gt.s32.totalorder %v422, 0
      %vm439 = vcmp.gt.s32.totalorder %v423, 0
      %vm440 = vcmp.gt.s32.totalorder %v424, 0
      %vm441 = vcmp.gt.s32.totalorder %v425, 0
      %v442 = vsel %vm434, 1, 0
      %v443 = vsel %vm435, 1, 0
      %v444 = vsel %vm436, 1, 0
      %v445 = vsel %vm437, 1, 0
      %v446 = vsel %vm438, 1, 0
      %v447 = vsel %vm439, 1, 0
      %v448 = vsel %vm440, 1, 0
      %v449 = vsel %vm441, 1, 0
      %vm450 = vcmp.eq.s32.totalorder %v442, 1
      %vm451 = vcmp.eq.s32.totalorder %v443, 1
      %vm452 = vcmp.eq.s32.totalorder %v444, 1
      %vm453 = vcmp.eq.s32.totalorder %v445, 1
      %vm454 = vcmp.eq.s32.totalorder %v446, 1
      %vm455 = vcmp.eq.s32.totalorder %v447, 1
      %vm456 = vcmp.eq.s32.totalorder %v448, 1
      %vm457 = vcmp.eq.s32.totalorder %v449, 1
      %v458 = vsel %vm450, %v426, 0.0
      %v459 = vsel %vm451, %v427, 0.0
      %v460 = vsel %vm452, %v428, 0.0
      %v461 = vsel %vm453, %v429, 0.0
      %v462 = vsel %vm454, %v430, 0.0
      %v463 = vsel %vm455, %v431, 0.0
      %v464 = vsel %vm456, %v432, 0.0
      %v465 = vsel %vm457, %v433, 0.0
      %v466 = vld [vmem:[%s3] sm:$0xff]
      %v467 = vld [vmem:[%s3 + $0x8] sm:$0xff]
      %v468 = vld [vmem:[%s3 + $0x10] sm:$0xff]
      %v469 = vld [vmem:[%s3 + $0x18] sm:$0xff]
      %v470 = vld [vmem:[%s3 + $0x20] sm:$0xff]
      %v471 = vld [vmem:[%s3 + $0x28] sm:$0xff]
      %v472 = vld [vmem:[%s3 + $0x30] sm:$0xff]
      %v473 = vld [vmem:[%s3 + $0x38] sm:$0xff]
      %v474 = vld [vmem:[%s3 + $0x40] sm:$0xff]
      %v475 = vld [vmem:[%s3 + $0x48] sm:$0xff]
      %v476 = vld [vmem:[%s3 + $0x50] sm:$0xff]
      %v477 = vld [vmem:[%s3 + $0x58] sm:$0xff]
      %v478 = vld [vmem:[%s3 + $0x60] sm:$0xff]
      %v479 = vld [vmem:[%s3 + $0x68] sm:$0xff]
      %v480 = vld [vmem:[%s3 + $0x70] sm:$0xff]
      %v481 = vld [vmem:[%s3 + $0x78] sm:$0xff]
      %v482 = vld [vmem:[#allocation2 + $0x1] sm:$0xff]
      %v483 = vld [vmem:[#allocation2 + $0x9] sm:$0xff]
      %v484 = vld [vmem:[#allocation2 + $0x11] sm:$0xff]
      %v485 = vld [vmem:[#allocation2 + $0x19] sm:$0xff]
      %v486 = vld [vmem:[#allocation2 + $0x21] sm:$0xff]
      %v487 = vld [vmem:[#allocation2 + $0x29] sm:$0xff]
      %v488 = vld [vmem:[#allocation2 + $0x31] sm:$0xff]
      %v489 = vld [vmem:[#allocation2 + $0x39] sm:$0xff]
      %s490 = scalar_lea.vmem %s3, 128
      %v491 = vld [vmem:[%s490] sm:$0xff]
      %v492 = vld [vmem:[%s490 + $0x8] sm:$0xff]
      %v493 = vld [vmem:[%s490 + $0x10] sm:$0xff]
      %v494 = vld [vmem:[%s490 + $0x18] sm:$0xff]
      %v495 = vld [vmem:[%s490 + $0x20] sm:$0xff]
      %v496 = vld [vmem:[%s490 + $0x28] sm:$0xff]
      %v497 = vld [vmem:[%s490 + $0x30] sm:$0xff]
      %v498 = vld [vmem:[%s490 + $0x38] sm:$0xff]
      %v499 = vld [vmem:[%s490 + $0x40] sm:$0xff]
      %v500 = vld [vmem:[%s490 + $0x48] sm:$0xff]
      %v501 = vld [vmem:[%s490 + $0x50] sm:$0xff]
      %v502 = vld [vmem:[%s490 + $0x58] sm:$0xff]
      %v503 = vld [vmem:[%s490 + $0x60] sm:$0xff]
      %v504 = vld [vmem:[%s490 + $0x68] sm:$0xff]
      %v505 = vld [vmem:[%s490 + $0x70] sm:$0xff]
      %v506 = vld [vmem:[%s490 + $0x78] sm:$0xff]
      %507 = vmatpush.msra.mxu0 %v506
      %508 = vmatpush.msra.mxu0 %v505
      %509 = vmatpush.msra.mxu0 %v504
      %510 = vmatpush.msra.mxu0 %v503
      %511 = vmatpush.msra.mxu0 %v502
      %512 = vmatpush.msra.mxu0 %v501
      %513 = vmatpush.msra.mxu0 %v500
      %514 = vmatpush.msra.mxu0 %v499
      %515 = vmatpush.msra.mxu0 %v498
      %516 = vmatpush.msra.mxu0 %v497
      %517 = vmatpush.msra.mxu0 %v496
      %518 = vmatpush.msra.mxu0 %v495
      %519 = vmatpush.msra.mxu0 %v494
      %520 = vmatpush.msra.mxu0 %v493
      %521 = vmatpush.msra.mxu0 %v492
      %522 = vmatpush.msra.mxu0 %v491
      %523 = vmatmul.f32.gmra.mxu0 %v482
      %v524 = vpop.f32.mrf.mxu0
      %v525 = vadd.f32 0.0, %v524
      %526 = vmatmul.f32.gmra.mxu0 %v483
      %v527 = vpop.f32.mrf.mxu0
      %v528 = vadd.f32 0.0, %v527
      %529 = vmatmul.f32.gmra.mxu0 %v484
      %v530 = vpop.f32.mrf.mxu0
      %v531 = vadd.f32 0.0, %v530
      %532 = vmatmul.f32.gmra.mxu0 %v485
      %v533 = vpop.f32.mrf.mxu0
      %v534 = vadd.f32 0.0, %v533
      %535 = vmatmul.f32.gmra.mxu0 %v486
      %v536 = vpop.f32.mrf.mxu0
      %v537 = vadd.f32 0.0, %v536
      %538 = vmatmul.f32.gmra.mxu0 %v487
      %v539 = vpop.f32.mrf.mxu0
      %v540 = vadd.f32 0.0, %v539
      %541 = vmatmul.f32.gmra.mxu0 %v488
      %v542 = vpop.f32.mrf.mxu0
      %v543 = vadd.f32 0.0, %v542
      %544 = vmatmul.f32.gmra.mxu0 %v489
      %v545 = vpop.f32.mrf.mxu0
      %v546 = vadd.f32 0.0, %v545
      %547 = vdwg.mxu0
      %548 = vmatpush.msra.mxu0 %v481
      %549 = vmatpush.msra.mxu0 %v480
      %550 = vmatpush.msra.mxu0 %v479
      %551 = vmatpush.msra.mxu0 %v478
      %552 = vmatpush.msra.mxu0 %v477
      %553 = vmatpush.msra.mxu0 %v476
      %554 = vmatpush.msra.mxu0 %v475
      %555 = vmatpush.msra.mxu0 %v474
      %556 = vmatpush.msra.mxu0 %v473
      %557 = vmatpush.msra.mxu0 %v472
      %558 = vmatpush.msra.mxu0 %v471
      %559 = vmatpush.msra.mxu0 %v470
      %560 = vmatpush.msra.mxu0 %v469
      %561 = vmatpush.msra.mxu0 %v468
      %562 = vmatpush.msra.mxu0 %v467
      %563 = vmatpush.msra.mxu0 %v466
      %564 = vmatmul.f32.gmra.mxu0 %v458
      %v565 = vpop.f32.mrf.mxu0
      %v566 = vadd.f32 %v525, %v565
      %567 = vmatmul.f32.gmra.mxu0 %v459
      %v568 = vpop.f32.mrf.mxu0
      %v569 = vadd.f32 %v528, %v568
      %570 = vmatmul.f32.gmra.mxu0 %v460
      %v571 = vpop.f32.mrf.mxu0
      %v572 = vadd.f32 %v531, %v571
      %573 = vmatmul.f32.gmra.mxu0 %v461
      %v574 = vpop.f32.mrf.mxu0
      %v575 = vadd.f32 %v534, %v574
      %576 = vmatmul.f32.gmra.mxu0 %v462
      %v577 = vpop.f32.mrf.mxu0
      %v578 = vadd.f32 %v537, %v577
      %579 = vmatmul.f32.gmra.mxu0 %v463
      %v580 = vpop.f32.mrf.mxu0
      %v581 = vadd.f32 %v540, %v580
      %582 = vmatmul.f32.gmra.mxu0 %v464
      %v583 = vpop.f32.mrf.mxu0
      %v584 = vadd.f32 %v543, %v583
      %585 = vmatmul.f32.gmra.mxu0 %v465
      %v586 = vpop.f32.mrf.mxu0
      %v587 = vadd.f32 %v546, %v586
      %588 = vdwg.mxu0
      %v589 = vld [vmem:[#allocation2 + $0x2] sm:$0xff]
      %v590 = vld [vmem:[#allocation2 + $0xa] sm:$0xff]
      %v591 = vld [vmem:[#allocation2 + $0x12] sm:$0xff]
      %v592 = vld [vmem:[#allocation2 + $0x1a] sm:$0xff]
      %v593 = vld [vmem:[#allocation2 + $0x22] sm:$0xff]
      %v594 = vld [vmem:[#allocation2 + $0x2a] sm:$0xff]
      %v595 = vld [vmem:[#allocation2 + $0x32] sm:$0xff]
      %v596 = vld [vmem:[#allocation2 + $0x3a] sm:$0xff]
      %vm597 = vcmp.lt.s32.totalorder %v418, 7
      %vm598 = vcmp.lt.s32.totalorder %v419, 7
      %vm599 = vcmp.lt.s32.totalorder %v420, 7
      %vm600 = vcmp.lt.s32.totalorder %v421, 7
      %vm601 = vcmp.lt.s32.totalorder %v422, 7
      %vm602 = vcmp.lt.s32.totalorder %v423, 7
      %vm603 = vcmp.lt.s32.totalorder %v424, 7
      %vm604 = vcmp.lt.s32.totalorder %v425, 7
      %v605 = vsel %vm597, 1, 0
      %v606 = vsel %vm598, 1, 0
      %v607 = vsel %vm599, 1, 0
      %v608 = vsel %vm600, 1, 0
      %v609 = vsel %vm601, 1, 0
      %v610 = vsel %vm602, 1, 0
      %v611 = vsel %vm603, 1, 0
      %v612 = vsel %vm604, 1, 0
      %vm613 = vcmp.eq.s32.totalorder %v605, 1
      %vm614 = vcmp.eq.s32.totalorder %v606, 1
      %vm615 = vcmp.eq.s32.totalorder %v607, 1
      %vm616 = vcmp.eq.s32.totalorder %v608, 1
      %vm617 = vcmp.eq.s32.totalorder %v609, 1
      %vm618 = vcmp.eq.s32.totalorder %v610, 1
      %vm619 = vcmp.eq.s32.totalorder %v611, 1
      %vm620 = vcmp.eq.s32.totalorder %v612, 1
      %v621 = vsel %vm613, %v589, 0.0
      %v622 = vsel %vm614, %v590, 0.0
      %v623 = vsel %vm615, %v591, 0.0
      %v624 = vsel %vm616, %v592, 0.0
      %v625 = vsel %vm617, %v593, 0.0
      %v626 = vsel %vm618, %v594, 0.0
      %v627 = vsel %vm619, %v595, 0.0
      %v628 = vsel %vm620, %v596, 0.0
      %s629 = scalar_lea.vmem %s3, 256
      %v630 = vld [vmem:[%s629] sm:$0xff]
      %v631 = vld [vmem:[%s629 + $0x8] sm:$0xff]
      %v632 = vld [vmem:[%s629 + $0x10] sm:$0xff]
      %v633 = vld [vmem:[%s629 + $0x18] sm:$0xff]
      %v634 = vld [vmem:[%s629 + $0x20] sm:$0xff]
      %v635 = vld [vmem:[%s629 + $0x28] sm:$0xff]
      %v636 = vld [vmem:[%s629 + $0x30] sm:$0xff]
      %v637 = vld [vmem:[%s629 + $0x38] sm:$0xff]
      %v638 = vld [vmem:[%s629 + $0x40] sm:$0xff]
      %v639 = vld [vmem:[%s629 + $0x48] sm:$0xff]
      %v640 = vld [vmem:[%s629 + $0x50] sm:$0xff]
      %v641 = vld [vmem:[%s629 + $0x58] sm:$0xff]
      %v642 = vld [vmem:[%s629 + $0x60] sm:$0xff]
      %v643 = vld [vmem:[%s629 + $0x68] sm:$0xff]
      %v644 = vld [vmem:[%s629 + $0x70] sm:$0xff]
      %v645 = vld [vmem:[%s629 + $0x78] sm:$0xff]
      %646 = vmatpush.msra.mxu0 %v645
      %647 = vmatpush.msra.mxu0 %v644
      %648 = vmatpush.msra.mxu0 %v643
      %649 = vmatpush.msra.mxu0 %v642
      %650 = vmatpush.msra.mxu0 %v641
      %651 = vmatpush.msra.mxu0 %v640
      %652 = vmatpush.msra.mxu0 %v639
      %653 = vmatpush.msra.mxu0 %v638
      %654 = vmatpush.msra.mxu0 %v637
      %655 = vmatpush.msra.mxu0 %v636
      %656 = vmatpush.msra.mxu0 %v635
      %657 = vmatpush.msra.mxu0 %v634
      %658 = vmatpush.msra.mxu0 %v633
      %659 = vmatpush.msra.mxu0 %v632
      %660 = vmatpush.msra.mxu0 %v631
      %661 = vmatpush.msra.mxu0 %v630
      %662 = vmatmul.f32.gmra.mxu0 %v621
      %v663 = vpop.f32.mrf.mxu0
      %v664 = vadd.f32 0.0, %v663
      %665 = vmatmul.f32.gmra.mxu0 %v622
      %v666 = vpop.f32.mrf.mxu0
      %v667 = vadd.f32 0.0, %v666
      %668 = vmatmul.f32.gmra.mxu0 %v623
      %v669 = vpop.f32.mrf.mxu0
      %v670 = vadd.f32 0.0, %v669
      %671 = vmatmul.f32.gmra.mxu0 %v624
      %v672 = vpop.f32.mrf.mxu0
      %v673 = vadd.f32 0.0, %v672
      %674 = vmatmul.f32.gmra.mxu0 %v625
      %v675 = vpop.f32.mrf.mxu0
      %v676 = vadd.f32 0.0, %v675
      %677 = vmatmul.f32.gmra.mxu0 %v626
      %v678 = vpop.f32.mrf.mxu0
      %v679 = vadd.f32 0.0, %v678
      %680 = vmatmul.f32.gmra.mxu0 %v627
      %v681 = vpop.f32.mrf.mxu0
      %v682 = vadd.f32 0.0, %v681
      %683 = vmatmul.f32.gmra.mxu0 %v628
      %v684 = vpop.f32.mrf.mxu0
      %v685 = vadd.f32 0.0, %v684
      %686 = vdwg.mxu0
      %v687 = vadd.f32 %v566, %v664
      %v688 = vadd.f32 %v569, %v667
      %v689 = vadd.f32 %v572, %v670
      %v690 = vadd.f32 %v575, %v673
      %v691 = vadd.f32 %v578, %v676
      %v692 = vadd.f32 %v581, %v679
      %v693 = vadd.f32 %v584, %v682
      %v694 = vadd.f32 %v587, %v685
      %v695 = vld [vmem:[#allocation2 + $0x8] sm:$0xff]
      %v696 = vld [vmem:[#allocation2 + $0x10] sm:$0xff]
      %v697 = vld [vmem:[#allocation2 + $0x18] sm:$0xff]
      %v698 = vld [vmem:[#allocation2 + $0x20] sm:$0xff]
      %v699 = vld [vmem:[#allocation2 + $0x28] sm:$0xff]
      %v700 = vld [vmem:[#allocation2 + $0x30] sm:$0xff]
      %v701 = vld [vmem:[#allocation2 + $0x38] sm:$0xff]
      %v702 = vld [vmem:[#allocation2 + $0x40] sm:$0xff]
      %v703 = vsel %vm450, %v695, 0.0
      %v704 = vsel %vm451, %v696, 0.0
      %v705 = vsel %vm452, %v697, 0.0
      %v706 = vsel %vm453, %v698, 0.0
      %v707 = vsel %vm454, %v699, 0.0
      %v708 = vsel %vm455, %v700, 0.0
      %v709 = vsel %vm456, %v701, 0.0
      %v710 = vsel %vm457, %v702, 0.0
      %s711 = scalar_lea.vmem %s3, 384
      %v712 = vld [vmem:[%s711] sm:$0xff]
      %v713 = vld [vmem:[%s711 + $0x8] sm:$0xff]
      %v714 = vld [vmem:[%s711 + $0x10] sm:$0xff]
      %v715 = vld [vmem:[%s711 + $0x18] sm:$0xff]
      %v716 = vld [vmem:[%s711 + $0x20] sm:$0xff]
      %v717 = vld [vmem:[%s711 + $0x28] sm:$0xff]
      %v718 = vld [vmem:[%s711 + $0x30] sm:$0xff]
      %v719 = vld [vmem:[%s711 + $0x38] sm:$0xff]
      %v720 = vld [vmem:[%s711 + $0x40] sm:$0xff]
      %v721 = vld [vmem:[%s711 + $0x48] sm:$0xff]
      %v722 = vld [vmem:[%s711 + $0x50] sm:$0xff]
      %v723 = vld [vmem:[%s711 + $0x58] sm:$0xff]
      %v724 = vld [vmem:[%s711 + $0x60] sm:$0xff]
      %v725 = vld [vmem:[%s711 + $0x68] sm:$0xff]
      %v726 = vld [vmem:[%s711 + $0x70] sm:$0xff]
      %v727 = vld [vmem:[%s711 + $0x78] sm:$0xff]
      %728 = vmatpush.msra.mxu0 %v727
      %729 = vmatpush.msra.mxu0 %v726
      %730 = vmatpush.msra.mxu0 %v725
      %731 = vmatpush.msra.mxu0 %v724
      %732 = vmatpush.msra.mxu0 %v723
      %733 = vmatpush.msra.mxu0 %v722
      %734 = vmatpush.msra.mxu0 %v721
      %735 = vmatpush.msra.mxu0 %v720
      %736 = vmatpush.msra.mxu0 %v719
      %737 = vmatpush.msra.mxu0 %v718
      %738 = vmatpush.msra.mxu0 %v717
      %739 = vmatpush.msra.mxu0 %v716
      %740 = vmatpush.msra.mxu0 %v715
      %741 = vmatpush.msra.mxu0 %v714
      %742 = vmatpush.msra.mxu0 %v713
      %743 = vmatpush.msra.mxu0 %v712
      %744 = vmatmul.f32.gmra.mxu0 %v703
      %v745 = vpop.f32.mrf.mxu0
      %v746 = vadd.f32 0.0, %v745
      %747 = vmatmul.f32.gmra.mxu0 %v704
      %v748 = vpop.f32.mrf.mxu0
      %v749 = vadd.f32 0.0, %v748
      %750 = vmatmul.f32.gmra.mxu0 %v705
      %v751 = vpop.f32.mrf.mxu0
      %v752 = vadd.f32 0.0, %v751
      %753 = vmatmul.f32.gmra.mxu0 %v706
      %v754 = vpop.f32.mrf.mxu0
      %v755 = vadd.f32 0.0, %v754
      %756 = vmatmul.f32.gmra.mxu0 %v707
      %v757 = vpop.f32.mrf.mxu0
      %v758 = vadd.f32 0.0, %v757
      %759 = vmatmul.f32.gmra.mxu0 %v708
      %v760 = vpop.f32.mrf.mxu0
      %v761 = vadd.f32 0.0, %v760
      %762 = vmatmul.f32.gmra.mxu0 %v709
      %v763 = vpop.f32.mrf.mxu0
      %v764 = vadd.f32 0.0, %v763
      %765 = vmatmul.f32.gmra.mxu0 %v710
      %v766 = vpop.f32.mrf.mxu0
      %v767 = vadd.f32 0.0, %v766
      %768 = vdwg.mxu0
      %v769 = vadd.f32 %v687, %v746
      %v770 = vadd.f32 %v688, %v749
      %v771 = vadd.f32 %v689, %v752
      %v772 = vadd.f32 %v690, %v755
      %v773 = vadd.f32 %v691, %v758
      %v774 = vadd.f32 %v692, %v761
      %v775 = vadd.f32 %v693, %v764
      %v776 = vadd.f32 %v694, %v767
      %v777 = vld [vmem:[#allocation2 + $0x9] sm:$0xff]
      %v778 = vld [vmem:[#allocation2 + $0x11] sm:$0xff]
      %v779 = vld [vmem:[#allocation2 + $0x19] sm:$0xff]
      %v780 = vld [vmem:[#allocation2 + $0x21] sm:$0xff]
      %v781 = vld [vmem:[#allocation2 + $0x29] sm:$0xff]
      %v782 = vld [vmem:[#allocation2 + $0x31] sm:$0xff]
      %v783 = vld [vmem:[#allocation2 + $0x39] sm:$0xff]
      %v784 = vld [vmem:[#allocation2 + $0x41] sm:$0xff]
      %s785 = scalar_lea.vmem %s3, 512
      %v786 = vld [vmem:[%s785] sm:$0xff]
      %v787 = vld [vmem:[%s785 + $0x8] sm:$0xff]
      %v788 = vld [vmem:[%s785 + $0x10] sm:$0xff]
      %v789 = vld [vmem:[%s785 + $0x18] sm:$0xff]
      %v790 = vld [vmem:[%s785 + $0x20] sm:$0xff]
      %v791 = vld [vmem:[%s785 + $0x28] sm:$0xff]
      %v792 = vld [vmem:[%s785 + $0x30] sm:$0xff]
      %v793 = vld [vmem:[%s785 + $0x38] sm:$0xff]
      %v794 = vld [vmem:[%s785 + $0x40] sm:$0xff]
      %v795 = vld [vmem:[%s785 + $0x48] sm:$0xff]
      %v796 = vld [vmem:[%s785 + $0x50] sm:$0xff]
      %v797 = vld [vmem:[%s785 + $0x58] sm:$0xff]
      %v798 = vld [vmem:[%s785 + $0x60] sm:$0xff]
      %v799 = vld [vmem:[%s785 + $0x68] sm:$0xff]
      %v800 = vld [vmem:[%s785 + $0x70] sm:$0xff]
      %v801 = vld [vmem:[%s785 + $0x78] sm:$0xff]
      %802 = vmatpush.msra.mxu0 %v801
      %803 = vmatpush.msra.mxu0 %v800
      %804 = vmatpush.msra.mxu0 %v799
      %805 = vmatpush.msra.mxu0 %v798
      %806 = vmatpush.msra.mxu0 %v797
      %807 = vmatpush.msra.mxu0 %v796
      %808 = vmatpush.msra.mxu0 %v795
      %809 = vmatpush.msra.mxu0 %v794
      %810 = vmatpush.msra.mxu0 %v793
      %811 = vmatpush.msra.mxu0 %v792
      %812 = vmatpush.msra.mxu0 %v791
      %813 = vmatpush.msra.mxu0 %v790
      %814 = vmatpush.msra.mxu0 %v789
      %815 = vmatpush.msra.mxu0 %v788
      %816 = vmatpush.msra.mxu0 %v787
      %817 = vmatpush.msra.mxu0 %v786
      %818 = vmatmul.f32.gmra.mxu0 %v777
      %v819 = vpop.f32.mrf.mxu0
      %v820 = vadd.f32 0.0, %v819
      %821 = vmatmul.f32.gmra.mxu0 %v778
      %v822 = vpop.f32.mrf.mxu0
      %v823 = vadd.f32 0.0, %v822
      %824 = vmatmul.f32.gmra.mxu0 %v779
      %v825 = vpop.f32.mrf.mxu0
      %v826 = vadd.f32 0.0, %v825
      %827 = vmatmul.f32.gmra.mxu0 %v780
      %v828 = vpop.f32.mrf.mxu0
      %v829 = vadd.f32 0.0, %v828
      %830 = vmatmul.f32.gmra.mxu0 %v781
      %v831 = vpop.f32.mrf.mxu0
      %v832 = vadd.f32 0.0, %v831
      %833 = vmatmul.f32.gmra.mxu0 %v782
      %v834 = vpop.f32.mrf.mxu0
      %v835 = vadd.f32 0.0, %v834
      %836 = vmatmul.f32.gmra.mxu0 %v783
      %v837 = vpop.f32.mrf.mxu0
      %v838 = vadd.f32 0.0, %v837
      %839 = vmatmul.f32.gmra.mxu0 %v784
      %v840 = vpop.f32.mrf.mxu0
      %v841 = vadd.f32 0.0, %v840
      %842 = vdwg.mxu0
      %v843 = vadd.f32 %v769, %v820
      %v844 = vadd.f32 %v770, %v823
      %v845 = vadd.f32 %v771, %v826
      %v846 = vadd.f32 %v772, %v829
      %v847 = vadd.f32 %v773, %v832
      %v848 = vadd.f32 %v774, %v835
      %v849 = vadd.f32 %v775, %v838
      %v850 = vadd.f32 %v776, %v841
      %v851 = vld [vmem:[#allocation2 + $0xa] sm:$0xff]
      %v852 = vld [vmem:[#allocation2 + $0x12] sm:$0xff]
      %v853 = vld [vmem:[#allocation2 + $0x1a] sm:$0xff]
      %v854 = vld [vmem:[#allocation2 + $0x22] sm:$0xff]
      %v855 = vld [vmem:[#allocation2 + $0x2a] sm:$0xff]
      %v856 = vld [vmem:[#allocation2 + $0x32] sm:$0xff]
      %v857 = vld [vmem:[#allocation2 + $0x3a] sm:$0xff]
      %v858 = vld [vmem:[#allocation2 + $0x42] sm:$0xff]
      %v859 = vsel %vm613, %v851, 0.0
      %v860 = vsel %vm614, %v852, 0.0
      %v861 = vsel %vm615, %v853, 0.0
      %v862 = vsel %vm616, %v854, 0.0
      %v863 = vsel %vm617, %v855, 0.0
      %v864 = vsel %vm618, %v856, 0.0
      %v865 = vsel %vm619, %v857, 0.0
      %v866 = vsel %vm620, %v858, 0.0
      %s867 = scalar_lea.vmem %s3, 640
      %v868 = vld [vmem:[%s867] sm:$0xff]
      %v869 = vld [vmem:[%s867 + $0x8] sm:$0xff]
      %v870 = vld [vmem:[%s867 + $0x10] sm:$0xff]
      %v871 = vld [vmem:[%s867 + $0x18] sm:$0xff]
      %v872 = vld [vmem:[%s867 + $0x20] sm:$0xff]
      %v873 = vld [vmem:[%s867 + $0x28] sm:$0xff]
      %v874 = vld [vmem:[%s867 + $0x30] sm:$0xff]
      %v875 = vld [vmem:[%s867 + $0x38] sm:$0xff]
      %v876 = vld [vmem:[%s867 + $0x40] sm:$0xff]
      %v877 = vld [vmem:[%s867 + $0x48] sm:$0xff]
      %v878 = vld [vmem:[%s867 + $0x50] sm:$0xff]
      %v879 = vld [vmem:[%s867 + $0x58] sm:$0xff]
      %v880 = vld [vmem:[%s867 + $0x60] sm:$0xff]
      %v881 = vld [vmem:[%s867 + $0x68] sm:$0xff]
      %v882 = vld [vmem:[%s867 + $0x70] sm:$0xff]
      %v883 = vld [vmem:[%s867 + $0x78] sm:$0xff]
      %884 = vmatpush.msra.mxu0 %v883
      %885 = vmatpush.msra.mxu0 %v882
      %886 = vmatpush.msra.mxu0 %v881
      %887 = vmatpush.msra.mxu0 %v880
      %888 = vmatpush.msra.mxu0 %v879
      %889 = vmatpush.msra.mxu0 %v878
      %890 = vmatpush.msra.mxu0 %v877
      %891 = vmatpush.msra.mxu0 %v876
      %892 = vmatpush.msra.mxu0 %v875
      %893 = vmatpush.msra.mxu0 %v874
      %894 = vmatpush.msra.mxu0 %v873
      %895 = vmatpush.msra.mxu0 %v872
      %896 = vmatpush.msra.mxu0 %v871
      %897 = vmatpush.msra.mxu0 %v870
      %898 = vmatpush.msra.mxu0 %v869
      %899 = vmatpush.msra.mxu0 %v868
      %900 = vmatmul.f32.gmra.mxu0 %v859
      %v901 = vpop.f32.mrf.mxu0
      %v902 = vadd.f32 0.0, %v901
      %903 = vmatmul.f32.gmra.mxu0 %v860
      %v904 = vpop.f32.mrf.mxu0
      %v905 = vadd.f32 0.0, %v904
      %906 = vmatmul.f32.gmra.mxu0 %v861
      %v907 = vpop.f32.mrf.mxu0
      %v908 = vadd.f32 0.0, %v907
      %909 = vmatmul.f32.gmra.mxu0 %v862
      %v910 = vpop.f32.mrf.mxu0
      %v911 = vadd.f32 0.0, %v910
      %912 = vmatmul.f32.gmra.mxu0 %v863
      %v913 = vpop.f32.mrf.mxu0
      %v914 = vadd.f32 0.0, %v913
      %915 = vmatmul.f32.gmra.mxu0 %v864
      %v916 = vpop.f32.mrf.mxu0
      %v917 = vadd.f32 0.0, %v916
      %918 = vmatmul.f32.gmra.mxu0 %v865
      %v919 = vpop.f32.mrf.mxu0
      %v920 = vadd.f32 0.0, %v919
      %921 = vmatmul.f32.gmra.mxu0 %v866
      %v922 = vpop.f32.mrf.mxu0
      %v923 = vadd.f32 0.0, %v922
      %924 = vdwg.mxu0
      %v925 = vadd.f32 %v843, %v902
      %v926 = vadd.f32 %v844, %v905
      %v927 = vadd.f32 %v845, %v908
      %v928 = vadd.f32 %v846, %v911
      %v929 = vadd.f32 %v847, %v914
      %v930 = vadd.f32 %v848, %v917
      %v931 = vadd.f32 %v849, %v920
      %v932 = vadd.f32 %v850, %v923
      %v933 = vld [vmem:[#allocation2 + $0x10] sm:$0xff]
      %v934 = vld [vmem:[#allocation2 + $0x18] sm:$0xff]
      %v935 = vld [vmem:[#allocation2 + $0x20] sm:$0xff]
      %v936 = vld [vmem:[#allocation2 + $0x28] sm:$0xff]
      %v937 = vld [vmem:[#allocation2 + $0x30] sm:$0xff]
      %v938 = vld [vmem:[#allocation2 + $0x38] sm:$0xff]
      %v939 = vld [vmem:[#allocation2 + $0x40] sm:$0xff]
      %v940 = vld [vmem:[#allocation2 + $0x48] sm:$0xff]
      %v941 = vsel %vm450, %v933, 0.0
      %v942 = vsel %vm451, %v934, 0.0
      %v943 = vsel %vm452, %v935, 0.0
      %v944 = vsel %vm453, %v936, 0.0
      %v945 = vsel %vm454, %v937, 0.0
      %v946 = vsel %vm455, %v938, 0.0
      %v947 = vsel %vm456, %v939, 0.0
      %v948 = vsel %vm457, %v940, 0.0
      %s949 = scalar_lea.vmem %s3, 768
      %v950 = vld [vmem:[%s949] sm:$0xff]
      %v951 = vld [vmem:[%s949 + $0x8] sm:$0xff]
      %v952 = vld [vmem:[%s949 + $0x10] sm:$0xff]
      %v953 = vld [vmem:[%s949 + $0x18] sm:$0xff]
      %v954 = vld [vmem:[%s949 + $0x20] sm:$0xff]
      %v955 = vld [vmem:[%s949 + $0x28] sm:$0xff]
      %v956 = vld [vmem:[%s949 + $0x30] sm:$0xff]
      %v957 = vld [vmem:[%s949 + $0x38] sm:$0xff]
      %v958 = vld [vmem:[%s949 + $0x40] sm:$0xff]
      %v959 = vld [vmem:[%s949 + $0x48] sm:$0xff]
      %v960 = vld [vmem:[%s949 + $0x50] sm:$0xff]
      %v961 = vld [vmem:[%s949 + $0x58] sm:$0xff]
      %v962 = vld [vmem:[%s949 + $0x60] sm:$0xff]
      %v963 = vld [vmem:[%s949 + $0x68] sm:$0xff]
      %v964 = vld [vmem:[%s949 + $0x70] sm:$0xff]
      %v965 = vld [vmem:[%s949 + $0x78] sm:$0xff]
      %966 = vmatpush.msra.mxu0 %v965
      %967 = vmatpush.msra.mxu0 %v964
      %968 = vmatpush.msra.mxu0 %v963
      %969 = vmatpush.msra.mxu0 %v962
      %970 = vmatpush.msra.mxu0 %v961
      %971 = vmatpush.msra.mxu0 %v960
      %972 = vmatpush.msra.mxu0 %v959
      %973 = vmatpush.msra.mxu0 %v958
      %974 = vmatpush.msra.mxu0 %v957
      %975 = vmatpush.msra.mxu0 %v956
      %976 = vmatpush.msra.mxu0 %v955
      %977 = vmatpush.msra.mxu0 %v954
      %978 = vmatpush.msra.mxu0 %v953
      %979 = vmatpush.msra.mxu0 %v952
      %980 = vmatpush.msra.mxu0 %v951
      %981 = vmatpush.msra.mxu0 %v950
      %982 = vmatmul.f32.gmra.mxu0 %v941
      %v983 = vpop.f32.mrf.mxu0
      %v984 = vadd.f32 0.0, %v983
      %985 = vmatmul.f32.gmra.mxu0 %v942
      %v986 = vpop.f32.mrf.mxu0
      %v987 = vadd.f32 0.0, %v986
      %988 = vmatmul.f32.gmra.mxu0 %v943
      %v989 = vpop.f32.mrf.mxu0
      %v990 = vadd.f32 0.0, %v989
      %991 = vmatmul.f32.gmra.mxu0 %v944
      %v992 = vpop.f32.mrf.mxu0
      %v993 = vadd.f32 0.0, %v992
      %994 = vmatmul.f32.gmra.mxu0 %v945
      %v995 = vpop.f32.mrf.mxu0
      %v996 = vadd.f32 0.0, %v995
      %997 = vmatmul.f32.gmra.mxu0 %v946
      %v998 = vpop.f32.mrf.mxu0
      %v999 = vadd.f32 0.0, %v998
      %1000 = vmatmul.f32.gmra.mxu0 %v947
      %v1001 = vpop.f32.mrf.mxu0
      %v1002 = vadd.f32 0.0, %v1001
      %1003 = vmatmul.f32.gmra.mxu0 %v948
      %v1004 = vpop.f32.mrf.mxu0
      %v1005 = vadd.f32 0.0, %v1004
      %1006 = vdwg.mxu0
      %v1007 = vadd.f32 %v925, %v984
      %v1008 = vadd.f32 %v926, %v987
      %v1009 = vadd.f32 %v927, %v990
      %v1010 = vadd.f32 %v928, %v993
      %v1011 = vadd.f32 %v929, %v996
      %v1012 = vadd.f32 %v930, %v999
      %v1013 = vadd.f32 %v931, %v1002
      %v1014 = vadd.f32 %v932, %v1005
      %v1015 = vld [vmem:[#allocation2 + $0x11] sm:$0xff]
      %v1016 = vld [vmem:[#allocation2 + $0x19] sm:$0xff]
      %v1017 = vld [vmem:[#allocation2 + $0x21] sm:$0xff]
      %v1018 = vld [vmem:[#allocation2 + $0x29] sm:$0xff]
      %v1019 = vld [vmem:[#allocation2 + $0x31] sm:$0xff]
      %v1020 = vld [vmem:[#allocation2 + $0x39] sm:$0xff]
      %v1021 = vld [vmem:[#allocation2 + $0x41] sm:$0xff]
      %v1022 = vld [vmem:[#allocation2 + $0x49] sm:$0xff]
      %s1023 = scalar_lea.vmem %s3, 896
      %v1024 = vld [vmem:[%s1023] sm:$0xff]
      %v1025 = vld [vmem:[%s1023 + $0x8] sm:$0xff]
      %v1026 = vld [vmem:[%s1023 + $0x10] sm:$0xff]
      %v1027 = vld [vmem:[%s1023 + $0x18] sm:$0xff]
      %v1028 = vld [vmem:[%s1023 + $0x20] sm:$0xff]
      %v1029 = vld [vmem:[%s1023 + $0x28] sm:$0xff]
      %v1030 = vld [vmem:[%s1023 + $0x30] sm:$0xff]
      %v1031 = vld [vmem:[%s1023 + $0x38] sm:$0xff]
      %v1032 = vld [vmem:[%s1023 + $0x40] sm:$0xff]
      %v1033 = vld [vmem:[%s1023 + $0x48] sm:$0xff]
      %v1034 = vld [vmem:[%s1023 + $0x50] sm:$0xff]
      %v1035 = vld [vmem:[%s1023 + $0x58] sm:$0xff]
      %v1036 = vld [vmem:[%s1023 + $0x60] sm:$0xff]
      %v1037 = vld [vmem:[%s1023 + $0x68] sm:$0xff]
      %v1038 = vld [vmem:[%s1023 + $0x70] sm:$0xff]
      %v1039 = vld [vmem:[%s1023 + $0x78] sm:$0xff]
      %1040 = vmatpush.msra.mxu0 %v1039
      %1041 = vmatpush.msra.mxu0 %v1038
      %1042 = vmatpush.msra.mxu0 %v1037
      %1043 = vmatpush.msra.mxu0 %v1036
      %1044 = vmatpush.msra.mxu0 %v1035
      %1045 = vmatpush.msra.mxu0 %v1034
      %1046 = vmatpush.msra.mxu0 %v1033
      %1047 = vmatpush.msra.mxu0 %v1032
      %1048 = vmatpush.msra.mxu0 %v1031
      %1049 = vmatpush.msra.mxu0 %v1030
      %1050 = vmatpush.msra.mxu0 %v1029
      %1051 = vmatpush.msra.mxu0 %v1028
      %1052 = vmatpush.msra.mxu0 %v1027
      %1053 = vmatpush.msra.mxu0 %v1026
      %1054 = vmatpush.msra.mxu0 %v1025
      %1055 = vmatpush.msra.mxu0 %v1024
      %1056 = vmatmul.f32.gmra.mxu0 %v1015
      %v1057 = vpop.f32.mrf.mxu0
      %v1058 = vadd.f32 0.0, %v1057
      %1059 = vmatmul.f32.gmra.mxu0 %v1016
      %v1060 = vpop.f32.mrf.mxu0
      %v1061 = vadd.f32 0.0, %v1060
      %1062 = vmatmul.f32.gmra.mxu0 %v1017
      %v1063 = vpop.f32.mrf.mxu0
      %v1064 = vadd.f32 0.0, %v1063
      %1065 = vmatmul.f32.gmra.mxu0 %v1018
      %v1066 = vpop.f32.mrf.mxu0
      %v1067 = vadd.f32 0.0, %v1066
      %1068 = vmatmul.f32.gmra.mxu0 %v1019
      %v1069 = vpop.f32.mrf.mxu0
      %v1070 = vadd.f32 0.0, %v1069
      %1071 = vmatmul.f32.gmra.mxu0 %v1020
      %v1072 = vpop.f32.mrf.mxu0
      %v1073 = vadd.f32 0.0, %v1072
      %1074 = vmatmul.f32.gmra.mxu0 %v1021
      %v1075 = vpop.f32.mrf.mxu0
      %v1076 = vadd.f32 0.0, %v1075
      %1077 = vmatmul.f32.gmra.mxu0 %v1022
      %v1078 = vpop.f32.mrf.mxu0
      %v1079 = vadd.f32 0.0, %v1078
      %1080 = vdwg.mxu0
      %v1081 = vadd.f32 %v1007, %v1058
      %v1082 = vadd.f32 %v1008, %v1061
      %v1083 = vadd.f32 %v1009, %v1064
      %v1084 = vadd.f32 %v1010, %v1067
      %v1085 = vadd.f32 %v1011, %v1070
      %v1086 = vadd.f32 %v1012, %v1073
      %v1087 = vadd.f32 %v1013, %v1076
      %v1088 = vadd.f32 %v1014, %v1079
      %v1089 = vld [vmem:[#allocation2 + $0x12] sm:$0xff]
      %v1090 = vld [vmem:[#allocation2 + $0x1a] sm:$0xff]
      %v1091 = vld [vmem:[#allocation2 + $0x22] sm:$0xff]
      %v1092 = vld [vmem:[#allocation2 + $0x2a] sm:$0xff]
      %v1093 = vld [vmem:[#allocation2 + $0x32] sm:$0xff]
      %v1094 = vld [vmem:[#allocation2 + $0x3a] sm:$0xff]
      %v1095 = vld [vmem:[#allocation2 + $0x42] sm:$0xff]
      %v1096 = vld [vmem:[#allocation2 + $0x4a] sm:$0xff]
      %v1097 = vsel %vm613, %v1089, 0.0
      %v1098 = vsel %vm614, %v1090, 0.0
      %v1099 = vsel %vm615, %v1091, 0.0
      %v1100 = vsel %vm616, %v1092, 0.0
      %v1101 = vsel %vm617, %v1093, 0.0
      %v1102 = vsel %vm618, %v1094, 0.0
      %v1103 = vsel %vm619, %v1095, 0.0
      %v1104 = vsel %vm620, %v1096, 0.0
      %s1105 = scalar_lea.vmem %s3, 1024
      %v1106 = vld [vmem:[%s1105] sm:$0xff]
      %v1107 = vld [vmem:[%s1105 + $0x8] sm:$0xff]
      %v1108 = vld [vmem:[%s1105 + $0x10] sm:$0xff]
      %v1109 = vld [vmem:[%s1105 + $0x18] sm:$0xff]
      %v1110 = vld [vmem:[%s1105 + $0x20] sm:$0xff]
      %v1111 = vld [vmem:[%s1105 + $0x28] sm:$0xff]
      %v1112 = vld [vmem:[%s1105 + $0x30] sm:$0xff]
      %v1113 = vld [vmem:[%s1105 + $0x38] sm:$0xff]
      %v1114 = vld [vmem:[%s1105 + $0x40] sm:$0xff]
      %v1115 = vld [vmem:[%s1105 + $0x48] sm:$0xff]
      %v1116 = vld [vmem:[%s1105 + $0x50] sm:$0xff]
      %v1117 = vld [vmem:[%s1105 + $0x58] sm:$0xff]
      %v1118 = vld [vmem:[%s1105 + $0x60] sm:$0xff]
      %v1119 = vld [vmem:[%s1105 + $0x68] sm:$0xff]
      %v1120 = vld [vmem:[%s1105 + $0x70] sm:$0xff]
      %v1121 = vld [vmem:[%s1105 + $0x78] sm:$0xff]
      %1122 = vmatpush.msra.mxu0 %v1121
      %1123 = vmatpush.msra.mxu0 %v1120
      %1124 = vmatpush.msra.mxu0 %v1119
      %1125 = vmatpush.msra.mxu0 %v1118
      %1126 = vmatpush.msra.mxu0 %v1117
      %1127 = vmatpush.msra.mxu0 %v1116
      %1128 = vmatpush.msra.mxu0 %v1115
      %1129 = vmatpush.msra.mxu0 %v1114
      %1130 = vmatpush.msra.mxu0 %v1113
      %1131 = vmatpush.msra.mxu0 %v1112
      %1132 = vmatpush.msra.mxu0 %v1111
      %1133 = vmatpush.msra.mxu0 %v1110
      %1134 = vmatpush.msra.mxu0 %v1109
      %1135 = vmatpush.msra.mxu0 %v1108
      %1136 = vmatpush.msra.mxu0 %v1107
      %1137 = vmatpush.msra.mxu0 %v1106
      %1138 = vmatmul.f32.gmra.mxu0 %v1097
      %v1139 = vpop.f32.mrf.mxu0
      %v1140 = vadd.f32 0.0, %v1139
      %1141 = vmatmul.f32.gmra.mxu0 %v1098
      %v1142 = vpop.f32.mrf.mxu0
      %v1143 = vadd.f32 0.0, %v1142
      %1144 = vmatmul.f32.gmra.mxu0 %v1099
      %v1145 = vpop.f32.mrf.mxu0
      %v1146 = vadd.f32 0.0, %v1145
      %1147 = vmatmul.f32.gmra.mxu0 %v1100
      %v1148 = vpop.f32.mrf.mxu0
      %v1149 = vadd.f32 0.0, %v1148
      %1150 = vmatmul.f32.gmra.mxu0 %v1101
      %v1151 = vpop.f32.mrf.mxu0
      %v1152 = vadd.f32 0.0, %v1151
      %1153 = vmatmul.f32.gmra.mxu0 %v1102
      %v1154 = vpop.f32.mrf.mxu0
      %v1155 = vadd.f32 0.0, %v1154
      %1156 = vmatmul.f32.gmra.mxu0 %v1103
      %v1157 = vpop.f32.mrf.mxu0
      %v1158 = vadd.f32 0.0, %v1157
      %1159 = vmatmul.f32.gmra.mxu0 %v1104
      %v1160 = vpop.f32.mrf.mxu0
      %v1161 = vadd.f32 0.0, %v1160
      %1162 = vdwg.mxu0
      %v1163 = vadd.f32 %v1081, %v1140
      %v1164 = vadd.f32 %v1082, %v1143
      %v1165 = vadd.f32 %v1083, %v1146
      %v1166 = vadd.f32 %v1084, %v1149
      %v1167 = vadd.f32 %v1085, %v1152
      %v1168 = vadd.f32 %v1086, %v1155
      %v1169 = vadd.f32 %v1087, %v1158
      %v1170 = vadd.f32 %v1088, %v1161
      %1171 = vst [vmem:[%s262] sm:$0xff] %v1163
      %1172 = vst [vmem:[%s262 + $0x8] sm:$0xff] %v1164
      %1173 = vst [vmem:[%s262 + $0x10] sm:$0xff] %v1165
      %1174 = vst [vmem:[%s262 + $0x18] sm:$0xff] %v1166
      %1175 = vst [vmem:[%s262 + $0x20] sm:$0xff] %v1167
      %1176 = vst [vmem:[%s262 + $0x28] sm:$0xff] %v1168
      %1177 = vst [vmem:[%s262 + $0x30] sm:$0xff] %v1169
      %1178 = vst [vmem:[%s262 + $0x38] sm:$0xff] %v1170
      %v1179 = vadd.f32 %v1163, %v1164
      %v1180 = vadd.f32 %v1179, %v1165
      %v1181 = vadd.f32 %v1180, %v1166
      %v1182 = vadd.f32 %v1181, %v1167
      %v1183 = vadd.f32 %v1182, %v1168
      %v1184 = vadd.f32 %v1183, %v1169
      %v1185 = vadd.f32 %v1184, %v1170
      %v1186 = vrot.slane %v1185, 4
      %v1187 = vadd.f32 %v1185, %v1186
      %v1188 = vrot.slane %v1187, 2
      %v1189 = vadd.f32 %v1187, %v1188
      %v1190 = vrot.slane %v1189, 1
      %v1191 = vadd.f32 %v1189, %v1190
      %1192 = vst [vmem:[%s265] sm:$0x1] %v1191
      %v1193 = vmul.f32 %v1163, %v1163
      %v1194 = vmul.f32 %v1164, %v1164
      %v1195 = vmul.f32 %v1165, %v1165
      %v1196 = vmul.f32 %v1166, %v1166
      %v1197 = vmul.f32 %v1167, %v1167
      %v1198 = vmul.f32 %v1168, %v1168
      %v1199 = vmul.f32 %v1169, %v1169
      %v1200 = vmul.f32 %v1170, %v1170
      %v1201 = vadd.f32 %v1193, %v1194
      %v1202 = vadd.f32 %v1201, %v1195
      %v1203 = vadd.f32 %v1202, %v1196
      %v1204 = vadd.f32 %v1203, %v1197
      %v1205 = vadd.f32 %v1204, %v1198
      %v1206 = vadd.f32 %v1205, %v1199
      %v1207 = vadd.f32 %v1206, %v1200
      %v1208 = vrot.slane %v1207, 4
      %v1209 = vadd.f32 %v1207, %v1208
      %v1210 = vrot.slane %v1209, 2
      %v1211 = vadd.f32 %v1209, %v1210
      %v1212 = vrot.slane %v1211, 1
      %v1213 = vadd.f32 %v1211, %v1212
      %1214 = vst [vmem:[%s268] sm:$0x1] %v1213
      %p1215 = scmp.lt.s32.totalorder %s18, 1
      %s1216 = scalar_select %p1215, %s18, 1
      %s1217 = smul.addr %s1216, 8
      %s1218 = smul.addr %s1217, 8
      %s1219 = scalar_lea.vmem %s4, %s1218
      %p1220 = scmp.lt.s32.totalorder %s18, 1
      %s1221 = scalar_select %p1220, %s18, 1
      %s1222 = scalar_lea.vmem %s5, %s1221
      %p1223 = scmp.lt.s32.totalorder %s18, 1
      %s1224 = scalar_select %p1223, %s18, 1
      %s1225 = scalar_lea.vmem %s6, %s1224
      // Predicated region
      $region37: #{residual_forward.4} parent=35 // pred_check
        %p1226 = pneg %p125
      $region38: #{residual_forward.4} parent=35 // pred_check_branch
        %1228 = sbr.rel (%p1226) target = $region40
      $region39: #{residual_forward.4} parent=35 // pred_region
        _
      $region40: #{residual_forward.4} parent=35 // pred_fallthru
        _
      // Predicated region
      $region41: #{residual_forward.4} parent=35 // pred_check
        %p1229 = pneg %p151
      $region42: #{residual_forward.4} parent=35 // pred_check_branch
        %1231 = sbr.rel (%p1229) target = $region44
      $region43: #{residual_forward.4} parent=35 // pred_region
        _
      $region44: #{residual_forward.4} parent=35 // pred_fallthru
        _
      // Predicated region
      $region45: #{residual_forward.4} parent=35 // pred_check
        %p1232 = pneg %p177
      $region46: #{residual_forward.4} parent=35 // pred_check_branch
        %1234 = sbr.rel (%p1232) target = $region48
      $region47: #{residual_forward.4} parent=35 // pred_region
        _
      $region48: #{residual_forward.4} parent=35 // pred_fallthru
        _
    $region36: #{residual_forward.4} parent=5 // pred_fallthru
      _
    %p1235 = scmp.le.s32.totalorder 2, %s13
    // Predicated region
    $region49: #{residual_forward.4} parent=5 // pred_check
      %p1236 = pneg %p1235
    $region50: #{residual_forward.4} parent=5 // pred_check_branch
      %1238 = sbr.rel (%p1236) target = $region52
    $region51: #{residual_forward.4} parent=5 // pred_region
      %s1239 = ssub.s32 %s13, 2
      // Predicated region
      $region53: #{residual_forward.4} parent=51 // pred_check
        %p1240 = pneg %p131
      $region54: #{residual_forward.4} parent=51 // pred_check_branch
        %1242 = sbr.rel (%p1240) target = $region56
      $region55: #{residual_forward.4} parent=51 // pred_region
        %p1243 = scmp.lt.s32.totalorder %s19, 1
        %s1244 = scalar_select %p1243, %s19, 1
        %s1245 = smul.addr %s1244, 8
        %s1246 = smul.addr %s1245, 8
        %s1247 = scalar_lea.vmem %s4, %s1246
      $region56: #{residual_forward.4} parent=51 // pred_fallthru
        _
      // Predicated region
      $region57: #{residual_forward.4} parent=51 // pred_check
        %p1248 = pneg %p157
      $region58: #{residual_forward.4} parent=51 // pred_check_branch
        %1250 = sbr.rel (%p1248) target = $region60
      $region59: #{residual_forward.4} parent=51 // pred_region
        %p1251 = scmp.lt.s32.totalorder %s19, 1
        %s1252 = scalar_select %p1251, %s19, 1
        %s1253 = scalar_lea.vmem %s5, %s1252
      $region60: #{residual_forward.4} parent=51 // pred_fallthru
        _
      // Predicated region
      $region61: #{residual_forward.4} parent=51 // pred_check
        %p1254 = pneg %p183
      $region62: #{residual_forward.4} parent=51 // pred_check_branch
        %1256 = sbr.rel (%p1254) target = $region64
      $region63: #{residual_forward.4} parent=51 // pred_region
        %p1257 = scmp.lt.s32.totalorder %s19, 1
        %s1258 = scalar_select %p1257, %s19, 1
        %s1259 = scalar_lea.vmem %s6, %s1258
      $region64: #{residual_forward.4} parent=51 // pred_fallthru
        _
    $region52: #{residual_forward.4} parent=5 // pred_fallthru
      _
  $region6: #{residual_forward.4} parent=0 // loop_footer
    %s17 = sadd.s32 1, %s13
  $region7: #{residual_forward.4} parent=0 // loop_footer_branch
    %12 = sbr.rel target = $region3
  $region8: #{residual_forward.4} parent=0 // loop_exit
    _

</llo_original>
